<compile_context>
chip_gen: v6e
topology: v6e:2x2x1
jax: 0.10.0
libtpu: 0.0.40
codegen_flags: <defaults>
</compile_context>

<pallas_src>
import functools

import numpy as np
import jax
import jax.numpy as jnp
from jax.experimental import pallas as pl
from jax.experimental.pallas import tpu as pltpu

EPS = 1e-5        # PyTorch BatchNorm2d default eps
LANE = 128
HALO = 8          # halo rows (>= board_w + 1) on each side of the activation


def _round_up(x, m):
    return (x + m - 1) // m * m


# ----------------------------- Pallas kernel ------------------------------- #

def _fused_resnet_kernel(x_ref, mask_ref, w_ref, scale_ref, bias_ref, out_ref,
                         xs_ref, res_ref, *, mpad, cpad, board_w):
    """One conv+BN(+residual)(+ReLU) layer per grid step.

    x_ref:     (Mpad, Cpad)          f32   zero-padded flattened NHWC input
    mask_ref:  (Mpad, 9)             f32   0/1 per-tap boundary masks
    w_ref:     (1, 9*Cpad, Cpad)     bf16  this layer's im2col-packed weights
    scale_ref: (1, 1, Cpad)          f32   folded BN scale (this layer)
    bias_ref:  (1, 1, Cpad)          f32   folded BN bias (+ conv bias)
    out_ref:   (Mpad, Cpad)          f32   written on the last layer only
    xs_ref:    (Mpad+2*HALO, Cpad)   f32   halo-padded activation carrier
    res_ref:   (Mpad, Cpad)          f32   ResBlock residual
    """
    li = pl.program_id(0)
    n_layers = pl.num_programs(0)

    # First layer: load the input into the halo-padded activation carrier.
    @pl.when(li == 0)
    def _():
        xs_ref[...] = jnp.zeros_like(xs_ref)
        xs_ref[HALO:HALO + mpad, :] = x_ref[...]
        res_ref[...] = jnp.zeros_like(res_ref)

    # Save the residual at the entry of every ResBlock (conv1 layers are the
    # odd layer indices except the final endBlock layer).
    is_conv1 = jnp.logical_and(li % 2 == 1, li < n_layers - 1)

    @pl.when(is_conv1)
    def _():
        res_ref[...] = xs_ref[HALO:HALO + mpad, :]

    # In-register im2col: 9 row-shifted, boundary-masked taps concatenated
    # along lanes into one (Mpad, 9*Cpad) bf16 slab.
    mask = mask_ref[...]                                   # (Mpad, 9) f32
    pieces = []
    for t in range(9):
        dh, dw = t // 3 - 1, t % 3 - 1
        off = dh * board_w + dw                            # row shift of tap t
        shifted = xs_ref[HALO + off:HALO + off + mpad, :]  # (Mpad, Cpad) f32
        pieces.append((shifted * mask[:, t:t + 1]).astype(jnp.bfloat16))
    patch = jnp.concatenate(pieces, axis=-1)               # (Mpad, 9*Cpad) bf16

    # One long-K MXU matmul per layer, f32 accumulation.
    acc = jnp.dot(patch, w_ref[0], preferred_element_type=jnp.float32)

    # Folded-BN affine (+ residual on conv2 layers) (+ ReLU except endBlock).
    y = acc * scale_ref[0] + bias_ref[0]
    is_conv2 = jnp.logical_and(li % 2 == 0, li > 0)        # last layer is odd
    y = jnp.where(is_conv2, y + res_ref[...], y)
    y = jnp.where(li < n_layers - 1, jnp.maximum(y, 0.0), y)

    xs_ref[HALO:HALO + mpad, :] = y

    @pl.when(li == n_layers - 1)
    def _():
        out_ref[...] = y


# ------------------------------- JAX glue ---------------------------------- #

def _build_tap_masks(n, h, w, mpad):
    """mask[i, t] = 1 iff flattened output row i (< N*H*W) reads an in-bounds
    source at 3x3 tap t = (kh*3 + kw); padded rows are all-zero."""
    m = n * h * w
    masks = np.zeros((mpad, 9), np.float32)
    for t in range(9):
        dh, dw = t // 3 - 1, t % 3 - 1
        for i in range(m):
            hi = (i // w) % h
            wi = i % w
            if 0 <= hi + dh < h and 0 <= wi + dw < w:
                masks[i, t] = 1.0
    return jnp.asarray(masks)


def representation_forward(x_nchw, masks, w_all, scales, biases):
    """Mirrors RepresentationFunctionResNet.forward (NCHW in, NCHW out)."""
    n, cin, h, w = x_nchw.shape
    m = n * h * w
    mpad = masks.shape[0]
    cpad = w_all.shape[-1]
    num_layers = w_all.shape[0]
    assert HALO >= w + 1, "halo must cover the largest tap row shift"

    # NCHW -> NHWC rows -> zero-padded (Mpad, Cpad) slab.
    x = jnp.transpose(x_nchw, (0, 2, 3, 1)).astype(jnp.float32).reshape(m, cin)
    x = jnp.pad(x, ((0, mpad - m), (0, cpad - cin)))

    kernel = functools.partial(_fused_resnet_kernel,
                               mpad=mpad, cpad=cpad, board_w=w)

    flops = 2 * num_layers * mpad * (9 * cpad) * cpad
    bytes_accessed = (2 * mpad * cpad * 4 + w_all.size * 2
                      + scales.size * 4 + biases.size * 4 + masks.size * 4)

    out = pl.pallas_call(
        kernel,
        grid=(num_layers,),
        in_specs=[
            pl.BlockSpec((mpad, cpad), lambda l: (0, 0)),          # input slab
            pl.BlockSpec((mpad, 9), lambda l: (0, 0)),             # tap masks
            pl.BlockSpec((1, 9 * cpad, cpad), lambda l: (l, 0, 0)),  # weights
            pl.BlockSpec((1, 1, cpad), lambda l: (l, 0, 0)),       # BN scale
            pl.BlockSpec((1, 1, cpad), lambda l: (l, 0, 0)),       # BN bias
        ],
        out_specs=pl.BlockSpec((mpad, cpad), lambda l: (0, 0)),
        out_shape=jax.ShapeDtypeStruct((mpad, cpad), jnp.float32),
        scratch_shapes=[
            pltpu.VMEM((mpad + 2 * HALO, cpad), jnp.float32),      # activation
            pltpu.VMEM((mpad, cpad), jnp.float32),                 # residual
        ],
        compiler_params=pltpu.CompilerParams(
            dimension_semantics=("arbitrary",)),
        cost_estimate=pl.CostEstimate(
            flops=flops, transcendentals=0, bytes_accessed=bytes_accessed),
    )(x, masks, w_all, scales, biases)

    out = out[:m, :3].reshape(n, h, w, 3)       # endBlock has 3 output planes
    return jnp.transpose(out, (0, 3, 1, 2))     # -> NCHW


# ------------------------- parameter construction -------------------------- #

def _make_conv_bn_params(key, cin, cout, conv_has_bias):
    """Deterministic conv weight + folded eval-mode BN affine."""
    ks = jax.random.split(key, 6)
    w = 0.05 * jax.random.normal(ks[0], (cout, cin, 3, 3), jnp.float32)  # OIHW
    gamma = 1.0 + 0.1 * jax.random.normal(ks[1], (cout,), jnp.float32)
    beta = 0.1 * jax.random.normal(ks[2], (cout,), jnp.float32)
    run_mean = 0.1 * jax.random.normal(ks[3], (cout,), jnp.float32)
    run_var = jax.nn.softplus(jax.random.normal(ks[4], (cout,), jnp.float32)) + 0.5
    conv_b = (0.05 * jax.random.normal(ks[5], (cout,), jnp.float32)
              if conv_has_bias else jnp.zeros((cout,), jnp.float32))

    bn_scale = gamma / jnp.sqrt(run_var + EPS)
    # BN(conv(x)+b) = bn_scale*conv(x) + (beta - mean*bn_scale + b*bn_scale)
    fused_bias = beta - run_mean * bn_scale + conv_b * bn_scale

    # OIHW -> (kh, kw, cin, cout) -> (9, cin, cout), tap t = kh*3 + kw.
    w_taps = jnp.transpose(w, (2, 3, 1, 0)).reshape(9, cin, cout)
    return {"w": w_taps, "scale": bn_scale, "bias": fused_bias}


def init_params(key, num_res_blocks, hidden_planes):
    keys = jax.random.split(key, 2 + 2 * num_res_blocks)
    layers = [_make_conv_bn_params(keys[0], 3, hidden_planes, True)]
    for i in range(num_res_blocks):
        layers.append(_make_conv_bn_params(keys[2 + 2 * i], hidden_planes,
                                           hidden_planes, False))
        layers.append(_make_conv_bn_params(keys[3 + 2 * i], hidden_planes,
                                           hidden_planes, False))
    layers.append(_make_conv_bn_params(keys[1], hidden_planes, 3, True))
    return layers


def pack_params(layers, cpad):
    """Per-layer im2col-packed (9*Cpad, Cpad) bf16 weights + f32 affines."""
    w_all, scales, biases = [], [], []
    for lyr in layers:
        _, cin, cout = lyr["w"].shape                    # (9, cin, cout)
        wp = np.zeros((9, cpad, cpad), np.float32)
        wp[:, :cin, :cout] = np.asarray(lyr["w"])
        w_all.append(wp.reshape(9 * cpad, cpad))
        sc = np.zeros((1, cpad), np.float32); sc[0, :cout] = np.asarray(lyr["scale"])
        bi = np.zeros((1, cpad), np.float32); bi[0, :cout] = np.asarray(lyr["bias"])
        scales.append(sc); biases.append(bi)
    w_all = jnp.asarray(np.stack(w_all)).astype(jnp.bfloat16)   # (L, 9*Cpad, Cpad)
    return w_all, jnp.asarray(np.stack(scales)), jnp.asarray(np.stack(biases))


# --------------------------- plain-JAX reference --------------------------- #

def reference_forward(x_nchw, layers, num_blocks):
    """f32 reference; weights and per-tap activations rounded through bf16 to
    match the kernel's matmul operands."""
    def conv_bn(x_nhwc, lyr, relu, residual=None):
        w_taps = lyr["w"].astype(jnp.bfloat16).astype(jnp.float32)
        nb, hh, ww, _ = x_nhwc.shape
        cout = w_taps.shape[-1]
        xp = jnp.pad(x_nhwc, ((0, 0), (1, 1), (1, 1), (0, 0)))
        xp = xp.astype(jnp.bfloat16).astype(jnp.float32)
        y = jnp.zeros((nb, hh, ww, cout), jnp.float32)
        for kh in range(3):
            for kw in range(3):
                tap = xp[:, kh:kh + hh, kw:kw + ww, :]
                y = y + jnp.einsum('nhwc,cd->nhwd', tap, w_taps[kh * 3 + kw])
        y = y * lyr["scale"] + lyr["bias"]
        if residual is not None:
            y = y + residual
        if relu:
            y = jnp.maximum(y, 0.0)
        return y

    x = jnp.transpose(x_nchw, (0, 2, 3, 1)).astype(jnp.float32)
    x = conv_bn(x, layers[0], True)
    for b in range(num_blocks):
        res = x
        hmid = conv_bn(x, layers[1 + 2 * b], True)
        x = conv_bn(hmid, layers[2 + 2 * b], True, residual=res)
    x = conv_bn(x, layers[1 + 2 * num_blocks], False)
    return jnp.transpose(x, (0, 3, 1, 2))


# ---------------------------------- main ----------------------------------- #

if __name__ == "__main__":
    # TicTacToe board 3x3, 3 input planes.  Module defaults are
    # hidden_planes=256 / num_resBlocks=16; kept small here.  Batch 16 so the
    # flattened M (=144) is a multiple of 16 and fills more MXU rows.
    N, C_IN, H, W = 16, 3, 3, 3
    HIDDEN = 32
    NUM_BLOCKS = 4

    root = jax.random.PRNGKey(0)
    k_params, k_x = jax.random.split(root)

    layers = init_params(k_params, NUM_BLOCKS, HIDDEN)

    m = N * H * W
    mpad = _round_up(m, 16)                           # bf16 sublane packing
    cpad = _round_up(max(C_IN, HIDDEN, 3), LANE)      # lane-dense channels

    masks = _build_tap_masks(N, H, W, mpad)
    w_all, scales, biases = pack_params(layers, cpad)

    x = jax.random.normal(k_x, (N, C_IN, H, W), jnp.float32)  # NCHW like PyTorch

    fwd = jax.jit(representation_forward)
    out = jax.block_until_ready(fwd(x, masks, w_all, scales, biases))
    assert out.shape == (N, 3, H, W), out.shape

    ref = reference_forward(x, layers, NUM_BLOCKS)
    if not np.allclose(np.asarray(out), np.asarray(ref), rtol=2e-2, atol=2e-2):
        err = float(np.max(np.abs(np.asarray(out) - np.asarray(ref))))
        raise AssertionError(
            f"Pallas output mismatch vs JAX reference (max abs err {err})")

    print("KERNEL_OK")
</pallas_src>

<mosaic_0001>
module attributes {stable_mosaic.version = 11 : i64} {
  func.func @_fused_resnet_kernel(%arg0: i32, %arg1: memref<144x128xf32, #tpu.memory_space<vmem>>, %arg2: memref<144x9xf32, #tpu.memory_space<vmem>>, %arg3: memref<1x1152x128xbf16, #tpu.memory_space<vmem>>, %arg4: memref<1x1x128xf32, #tpu.memory_space<vmem>>, %arg5: memref<1x1x128xf32, #tpu.memory_space<vmem>>, %arg6: memref<144x128xf32, #tpu.memory_space<vmem>>, %arg7: memref<160x128xf32, #tpu.memory_space<vmem>>, %arg8: memref<144x128xf32, #tpu.memory_space<vmem>>) attributes {dimension_semantics = [#tpu.dimension_semantics<arbitrary>], iteration_bounds = array<i64: 10>, scalar_prefetch = 0 : i64, scratch_operands = 2 : i64, tpu.core_type = #tpu.core_type<tc>, window_params = [{pipeline_mode = #tpu.pipeline_mode<synchronous>, transform_indices = @transform_0, window_bounds = array<i64: 144, 128>}, {pipeline_mode = #tpu.pipeline_mode<synchronous>, transform_indices = @transform_1, window_bounds = array<i64: 144, 9>}, {transform_indices = @transform_2, window_bounds = array<i64: 1, 1152, 128>}, {transform_indices = @transform_3, window_bounds = array<i64: 1, 1, 128>}, {transform_indices = @transform_4, window_bounds = array<i64: 1, 1, 128>}, {pipeline_mode = #tpu.pipeline_mode<synchronous>, transform_indices = @transform_5, window_bounds = array<i64: 144, 128>}]} {
    %c0_i32 = arith.constant 0 : i32
    %0 = arith.cmpi eq, %arg0, %c0_i32 : i32
    %1 = arith.extui %0 : i1 to i32
    %c0_i32_0 = arith.constant 0 : i32
    %2 = arith.cmpi ne, %1, %c0_i32_0 : i32
    scf.if %2 {
      %cst_42 = arith.constant 0.000000e+00 : f32
      %100 = vector.broadcast %cst_42 : f32 to vector<160x128xf32>
      %c0_43 = arith.constant 0 : index
      %c0_44 = arith.constant 0 : index
      %101 = vector.load %arg7[%c0_43, %c0_44] : memref<160x128xf32, #tpu.memory_space<vmem>>, vector<160x128xf32>
      tpu.vector_store %arg7[%c0_43, %c0_44], %100 {strides = array<i32>} : memref<160x128xf32, #tpu.memory_space<vmem>>, vector<160x128xf32>,
      %c0_45 = arith.constant 0 : index
      %c0_46 = arith.constant 0 : index
      %102 = vector.load %arg1[%c0_45, %c0_46] : memref<144x128xf32, #tpu.memory_space<vmem>>, vector<144x128xf32>
      %c8_47 = arith.constant 8 : index
      %c0_48 = arith.constant 0 : index
      %103 = vector.load %arg7[%c8_47, %c0_48] : memref<160x128xf32, #tpu.memory_space<vmem>>, vector<144x128xf32>
      tpu.vector_store %arg7[%c8_47, %c0_48], %102 {strides = array<i32>} : memref<160x128xf32, #tpu.memory_space<vmem>>, vector<144x128xf32>,
      %cst_49 = arith.constant 0.000000e+00 : f32
      %104 = vector.broadcast %cst_49 : f32 to vector<144x128xf32>
      %c0_50 = arith.constant 0 : index
      %c0_51 = arith.constant 0 : index
      %105 = vector.load %arg8[%c0_50, %c0_51] : memref<144x128xf32, #tpu.memory_space<vmem>>, vector<144x128xf32>
      tpu.vector_store %arg8[%c0_50, %c0_51], %104 {strides = array<i32>} : memref<144x128xf32, #tpu.memory_space<vmem>>, vector<144x128xf32>,
    } else {
    }
    %c2_i32 = arith.constant 2 : i32
    %c0_i32_1 = arith.constant 0 : i32
    %3 = arith.cmpi eq, %c2_i32, %c0_i32_1 : i32
    %c1_i32 = arith.constant 1 : i32
    %4 = arith.select %3, %c1_i32, %c2_i32 : i32
    %5 = arith.remsi %arg0, %4 : i32
    %c0_i32_2 = arith.constant 0 : i32
    %6 = arith.cmpi ne, %5, %c0_i32_2 : i32
    %c0_i32_3 = arith.constant 0 : i32
    %7 = arith.cmpi slt, %5, %c0_i32_3 : i32
    %c0_i32_4 = arith.constant 0 : i32
    %8 = arith.cmpi slt, %4, %c0_i32_4 : i32
    %9 = arith.xori %7, %8 : i1
    %10 = arith.andi %9, %6 : i1
    %11 = arith.addi %5, %4 : i32
    %12 = arith.select %10, %11, %5 : i32
    %c1_i32_5 = arith.constant 1 : i32
    %13 = arith.cmpi eq, %12, %c1_i32_5 : i32
    %c9_i32 = arith.constant 9 : i32
    %14 = arith.cmpi slt, %arg0, %c9_i32 : i32
    %15 = arith.andi %13, %14 : i1
    %16 = arith.extui %15 : i1 to i32
    %c0_i32_6 = arith.constant 0 : i32
    %17 = arith.cmpi ne, %16, %c0_i32_6 : i32
    scf.if %17 {
      %c8_42 = arith.constant 8 : index
      %c0_43 = arith.constant 0 : index
      %100 = vector.load %arg7[%c8_42, %c0_43] : memref<160x128xf32, #tpu.memory_space<vmem>>, vector<144x128xf32>
      %c0_44 = arith.constant 0 : index
      %c0_45 = arith.constant 0 : index
      %101 = vector.load %arg8[%c0_44, %c0_45] : memref<144x128xf32, #tpu.memory_space<vmem>>, vector<144x128xf32>
      tpu.vector_store %arg8[%c0_44, %c0_45], %100 {strides = array<i32>} : memref<144x128xf32, #tpu.memory_space<vmem>>, vector<144x128xf32>,
    } else {
    }
    %c0 = arith.constant 0 : index
    %c0_7 = arith.constant 0 : index
    %18 = vector.load %arg2[%c0, %c0_7] : memref<144x9xf32, #tpu.memory_space<vmem>>, vector<144x9xf32>
    %c4 = arith.constant 4 : index
    %c0_8 = arith.constant 0 : index
    %19 = vector.load %arg7[%c4, %c0_8] : memref<160x128xf32, #tpu.memory_space<vmem>>, vector<144x128xf32>
    %20 = vector.extract_strided_slice %18 {offsets = [0, 0], sizes = [144, 1], strides = [1, 1]} : vector<144x9xf32> to vector<144x1xf32>
    %21 = vector.broadcast %20 : vector<144x1xf32> to vector<144x128xf32>
    %22 = arith.mulf %19, %21 : vector<144x128xf32>
    %23 = arith.truncf %22 : vector<144x128xf32> to vector<144x128xbf16>
    %c5 = arith.constant 5 : index
    %c0_9 = arith.constant 0 : index
    %24 = vector.load %arg7[%c5, %c0_9] : memref<160x128xf32, #tpu.memory_space<vmem>>, vector<144x128xf32>
    %25 = vector.extract_strided_slice %18 {offsets = [0, 1], sizes = [144, 1], strides = [1, 1]} : vector<144x9xf32> to vector<144x1xf32>
    %26 = vector.broadcast %25 : vector<144x1xf32> to vector<144x128xf32>
    %27 = arith.mulf %24, %26 : vector<144x128xf32>
    %28 = arith.truncf %27 : vector<144x128xf32> to vector<144x128xbf16>
    %c6 = arith.constant 6 : index
    %c0_10 = arith.constant 0 : index
    %29 = vector.load %arg7[%c6, %c0_10] : memref<160x128xf32, #tpu.memory_space<vmem>>, vector<144x128xf32>
    %30 = vector.extract_strided_slice %18 {offsets = [0, 2], sizes = [144, 1], strides = [1, 1]} : vector<144x9xf32> to vector<144x1xf32>
    %31 = vector.broadcast %30 : vector<144x1xf32> to vector<144x128xf32>
    %32 = arith.mulf %29, %31 : vector<144x128xf32>
    %33 = arith.truncf %32 : vector<144x128xf32> to vector<144x128xbf16>
    %c7 = arith.constant 7 : index
    %c0_11 = arith.constant 0 : index
    %34 = vector.load %arg7[%c7, %c0_11] : memref<160x128xf32, #tpu.memory_space<vmem>>, vector<144x128xf32>
    %35 = vector.extract_strided_slice %18 {offsets = [0, 3], sizes = [144, 1], strides = [1, 1]} : vector<144x9xf32> to vector<144x1xf32>
    %36 = vector.broadcast %35 : vector<144x1xf32> to vector<144x128xf32>
    %37 = arith.mulf %34, %36 : vector<144x128xf32>
    %38 = arith.truncf %37 : vector<144x128xf32> to vector<144x128xbf16>
    %c8 = arith.constant 8 : index
    %c0_12 = arith.constant 0 : index
    %39 = vector.load %arg7[%c8, %c0_12] : memref<160x128xf32, #tpu.memory_space<vmem>>, vector<144x128xf32>
    %40 = vector.extract_strided_slice %18 {offsets = [0, 4], sizes = [144, 1], strides = [1, 1]} : vector<144x9xf32> to vector<144x1xf32>
    %41 = vector.broadcast %40 : vector<144x1xf32> to vector<144x128xf32>
    %42 = arith.mulf %39, %41 : vector<144x128xf32>
    %43 = arith.truncf %42 : vector<144x128xf32> to vector<144x128xbf16>
    %c9 = arith.constant 9 : index
    %c0_13 = arith.constant 0 : index
    %44 = vector.load %arg7[%c9, %c0_13] : memref<160x128xf32, #tpu.memory_space<vmem>>, vector<144x128xf32>
    %45 = vector.extract_strided_slice %18 {offsets = [0, 5], sizes = [144, 1], strides = [1, 1]} : vector<144x9xf32> to vector<144x1xf32>
    %46 = vector.broadcast %45 : vector<144x1xf32> to vector<144x128xf32>
    %47 = arith.mulf %44, %46 : vector<144x128xf32>
    %48 = arith.truncf %47 : vector<144x128xf32> to vector<144x128xbf16>
    %c10 = arith.constant 10 : index
    %c0_14 = arith.constant 0 : index
    %49 = vector.load %arg7[%c10, %c0_14] : memref<160x128xf32, #tpu.memory_space<vmem>>, vector<144x128xf32>
    %50 = vector.extract_strided_slice %18 {offsets = [0, 6], sizes = [144, 1], strides = [1, 1]} : vector<144x9xf32> to vector<144x1xf32>
    %51 = vector.broadcast %50 : vector<144x1xf32> to vector<144x128xf32>
    %52 = arith.mulf %49, %51 : vector<144x128xf32>
    %53 = arith.truncf %52 : vector<144x128xf32> to vector<144x128xbf16>
    %c11 = arith.constant 11 : index
    %c0_15 = arith.constant 0 : index
    %54 = vector.load %arg7[%c11, %c0_15] : memref<160x128xf32, #tpu.memory_space<vmem>>, vector<144x128xf32>
    %55 = vector.extract_strided_slice %18 {offsets = [0, 7], sizes = [144, 1], strides = [1, 1]} : vector<144x9xf32> to vector<144x1xf32>
    %56 = vector.broadcast %55 : vector<144x1xf32> to vector<144x128xf32>
    %57 = arith.mulf %54, %56 : vector<144x128xf32>
    %58 = arith.truncf %57 : vector<144x128xf32> to vector<144x128xbf16>
    %c12 = arith.constant 12 : index
    %c0_16 = arith.constant 0 : index
    %59 = vector.load %arg7[%c12, %c0_16] : memref<160x128xf32, #tpu.memory_space<vmem>>, vector<144x128xf32>
    %60 = vector.extract_strided_slice %18 {offsets = [0, 8], sizes = [144, 1], strides = [1, 1]} : vector<144x9xf32> to vector<144x1xf32>
    %61 = vector.broadcast %60 : vector<144x1xf32> to vector<144x128xf32>
    %62 = arith.mulf %59, %61 : vector<144x128xf32>
    %63 = arith.truncf %62 : vector<144x128xf32> to vector<144x128xbf16>
    %64 = tpu.concatenate %23, %28, %33, %38, %43, %48, %53, %58, %63 in 1 : vector<144x128xbf16>, vector<144x128xbf16>, vector<144x128xbf16>, vector<144x128xbf16>, vector<144x128xbf16>, vector<144x128xbf16>, vector<144x128xbf16>, vector<144x128xbf16>, vector<144x128xbf16> -> vector<144x1152xbf16>
    %c0_17 = arith.constant 0 : index
    %c0_18 = arith.constant 0 : index
    %c0_19 = arith.constant 0 : index
    %65 = vector.load %arg3[%c0_17, %c0_18, %c0_19] : memref<1x1152x128xbf16, #tpu.memory_space<vmem>>, vector<1x1152x128xbf16>
    %66 = vector.shape_cast %65 : vector<1x1152x128xbf16> to vector<1152x128xbf16>
    %cst = arith.constant dense<0.000000e+00> : vector<144x128xf32>
    %67 = tpu.matmul %64, %66, %cst {dimension_numbers = #tpu.dot_dimension_numbers<[1], [0], [0], [1], [0, 0, 1, 1], [], []>} : vector<144x1152xbf16>, vector<1152x128xbf16>, vector<144x128xf32> -> vector<144x128xf32>
    %c0_20 = arith.constant 0 : index
    %c0_21 = arith.constant 0 : index
    %c0_22 = arith.constant 0 : index
    %68 = vector.load %arg4[%c0_20, %c0_21, %c0_22] : memref<1x1x128xf32, #tpu.memory_space<vmem>>, vector<1x1x128xf32>
    %69 = vector.shape_cast %68 : vector<1x1x128xf32> to vector<1x128xf32>
    %70 = vector.broadcast %69 : vector<1x128xf32> to vector<144x128xf32>
    %71 = arith.mulf %67, %70 : vector<144x128xf32>
    %c0_23 = arith.constant 0 : index
    %c0_24 = arith.constant 0 : index
    %c0_25 = arith.constant 0 : index
    %72 = vector.load %arg5[%c0_23, %c0_24, %c0_25] : memref<1x1x128xf32, #tpu.memory_space<vmem>>, vector<1x1x128xf32>
    %73 = vector.shape_cast %72 : vector<1x1x128xf32> to vector<1x128xf32>
    %74 = vector.broadcast %73 : vector<1x128xf32> to vector<144x128xf32>
    %75 = arith.addf %71, %74 : vector<144x128xf32>
    %c2_i32_26 = arith.constant 2 : i32
    %c0_i32_27 = arith.constant 0 : i32
    %76 = arith.cmpi eq, %c2_i32_26, %c0_i32_27 : i32
    %c1_i32_28 = arith.constant 1 : i32
    %77 = arith.select %76, %c1_i32_28, %c2_i32_26 : i32
    %78 = arith.remsi %arg0, %77 : i32
    %c0_i32_29 = arith.constant 0 : i32
    %79 = arith.cmpi ne, %78, %c0_i32_29 : i32
    %c0_i32_30 = arith.constant 0 : i32
    %80 = arith.cmpi slt, %78, %c0_i32_30 : i32
    %c0_i32_31 = arith.constant 0 : i32
    %81 = arith.cmpi slt, %77, %c0_i32_31 : i32
    %82 = arith.xori %80, %81 : i1
    %83 = arith.andi %82, %79 : i1
    %84 = arith.addi %78, %77 : i32
    %85 = arith.select %83, %84, %78 : i32
    %c0_i32_32 = arith.constant 0 : i32
    %86 = arith.cmpi eq, %85, %c0_i32_32 : i32
    %c0_i32_33 = arith.constant 0 : i32
    %87 = arith.cmpi sgt, %arg0, %c0_i32_33 : i32
    %88 = arith.andi %86, %87 : i1
    %c0_34 = arith.constant 0 : index
    %c0_35 = arith.constant 0 : index
    %89 = vector.load %arg8[%c0_34, %c0_35] : memref<144x128xf32, #tpu.memory_space<vmem>>, vector<144x128xf32>
    %90 = arith.addf %75, %89 : vector<144x128xf32>
    %91 = arith.select %88, %90, %75 : vector<144x128xf32>
    %c9_i32_36 = arith.constant 9 : i32
    %92 = arith.cmpi slt, %arg0, %c9_i32_36 : i32
    %cst_37 = arith.constant 0.000000e+00 : f32
    %93 = vector.broadcast %cst_37 : f32 to vector<144x128xf32>
    %94 = arith.maximumf %91, %93 : vector<144x128xf32>
    %95 = arith.select %92, %94, %91 : vector<144x128xf32>
    %c8_38 = arith.constant 8 : index
    %c0_39 = arith.constant 0 : index
    %96 = vector.load %arg7[%c8_38, %c0_39] : memref<160x128xf32, #tpu.memory_space<vmem>>, vector<144x128xf32>
    tpu.vector_store %arg7[%c8_38, %c0_39], %95 {strides = array<i32>} : memref<160x128xf32, #tpu.memory_space<vmem>>, vector<144x128xf32>,
    %c9_i32_40 = arith.constant 9 : i32
    %97 = arith.cmpi eq, %arg0, %c9_i32_40 : i32
    %98 = arith.extui %97 : i1 to i32
    %c0_i32_41 = arith.constant 0 : i32
    %99 = arith.cmpi ne, %98, %c0_i32_41 : i32
    scf.if %99 {
      %c0_42 = arith.constant 0 : index
      %c0_43 = arith.constant 0 : index
      %100 = vector.load %arg6[%c0_42, %c0_43] : memref<144x128xf32, #tpu.memory_space<vmem>>, vector<144x128xf32>
      tpu.vector_store %arg6[%c0_42, %c0_43], %95 {strides = array<i32>} : memref<144x128xf32, #tpu.memory_space<vmem>>, vector<144x128xf32>,
    } else {
    }
    return
  }
  func.func @transform_0(%arg0: i32) -> (i32, i32) {
    %c0_i32 = arith.constant 0 : i32
    %c0_i32_0 = arith.constant 0 : i32
    %c0_i32_1 = arith.constant 0 : i32
    return %c0_i32, %c0_i32_0 : i32, i32
  }
  func.func @transform_1(%arg0: i32) -> (i32, i32) {
    %c0_i32 = arith.constant 0 : i32
    %c0_i32_0 = arith.constant 0 : i32
    %c0_i32_1 = arith.constant 0 : i32
    return %c0_i32, %c0_i32_0 : i32, i32
  }
  func.func @transform_2(%arg0: i32) -> (i32, i32, i32) {
    %c0_i32 = arith.constant 0 : i32
    %c0_i32_0 = arith.constant 0 : i32
    %c0_i32_1 = arith.constant 0 : i32
    return %arg0, %c0_i32, %c0_i32_0 : i32, i32, i32
  }
  func.func @transform_3(%arg0: i32) -> (i32, i32, i32) {
    %c0_i32 = arith.constant 0 : i32
    %c0_i32_0 = arith.constant 0 : i32
    %c0_i32_1 = arith.constant 0 : i32
    return %arg0, %c0_i32, %c0_i32_0 : i32, i32, i32
  }
  func.func @transform_4(%arg0: i32) -> (i32, i32, i32) {
    %c0_i32 = arith.constant 0 : i32
    %c0_i32_0 = arith.constant 0 : i32
    %c0_i32_1 = arith.constant 0 : i32
    return %arg0, %c0_i32, %c0_i32_0 : i32, i32, i32
  }
  func.func @transform_5(%arg0: i32) -> (i32, i32) {
    %c0_i32 = arith.constant 0 : i32
    %c0_i32_0 = arith.constant 0 : i32
    %c0_i32_1 = arith.constant 0 : i32
    return %c0_i32, %c0_i32_0 : i32, i32
  }
}

</mosaic_0001>

<llo_original>
// kernel: representation_forward.1
$region0: #{representation_forward.1}
  #allocation0 [shape = 'u32[]', space=smem, size = 0x4, offset = 0x4, fixed_abs, tag = 'smem constant byte address 0x4 - core index']
  #allocation1 [shape = 'u32[144,128]{1,0:T(1,128)}', space=vmem, size = 0x12000, scoped, tag = 'internal scratch']
  #allocation2 [shape = 'f32[160,128]{1,0:T(8,128)}', space=vmem, size = 0x14000, scoped, tag = 'scratch operand']
  #allocation3 [shape = 'f32[144,128]{1,0:T(8,128)}', space=vmem, size = 0x12000, scoped, tag = 'scratch operand']
  %s0 = inlined_call_operand.vmem [shape: f32[144,128], index: 0, kind: input, shape index: {}]
  %s1 = inlined_call_operand.vmem [shape: f32[144,9], index: 1, kind: input, shape index: {}]
  %s2 = inlined_call_operand.hbm [shape: bf16[10,1152,128], index: 2, kind: input, shape index: {}]
  %s3 = inlined_call_operand.hbm [shape: f32[10,1,128], index: 3, kind: input, shape index: {}]
  %s4 = inlined_call_operand.hbm [shape: f32[10,1,128], index: 4, kind: input, shape index: {}]
  %s5 = inlined_call_operand.vmem [shape: f32[144,128], index: 5, kind: output, shape index: {}]
  %s6 = sld [smem:[#allocation0]]
  $region77: #{representation_forward.1} parent=0
    _
  %s8 = ssub.s32 1, %s6
  %s9 = scalar_select 0, %s8, %s6
  $region1: #{representation_forward.1} parent=0
    #allocation4 [shape = 'u8[589824]{0}', space=vmem, size = 0x90000, scoped, tag = 'input window, operand 2']
    #allocation5 [shape = 's32[2]{0}', space=sflag, size = 0x8, scoped, tag = 'scoped memory for representation_forward.1']
    #allocation6 [shape = 'u8[1024]{0}', space=vmem, size = 0x400, scoped, tag = 'input window, operand 3']
    #allocation7 [shape = 's32[2]{0}', space=sflag, size = 0x8, scoped, tag = 'scoped memory for representation_forward.1']
    #allocation8 [shape = 'u8[1024]{0}', space=vmem, size = 0x400, scoped, tag = 'input window, operand 4']
    %10 = vsyncpa [#allocation5], 0
    %s11 = scalar_lea.sflag [#allocation5], 1
    %12 = vsyncpa %s11, 0
    %13 = vsyncpa [#allocation7], 0
    %s14 = scalar_lea.sflag [#allocation7], 1
    %15 = vsyncpa %s14, 0
    loop: start=0, step=1, limit=12
    $region2: #{representation_forward.1} parent=1 // loop_pre_header
      _
    $region3: #{representation_forward.1} parent=1 // loop_header
      %s17 = sphi 0, %s21
      %p18 = scmp.ge.s32.totalorder %s17, 12
      %s25 = sphi 0, %s25
      %s27 = sphi 0, %s25
      %s28 = sphi 0, %s27
      %s42 = sphi 0, %s28
      %s46 = sphi 0, %s46
      %s48 = sphi 0, %s46
      %s49 = sphi 0, %s48
      %s63 = sphi 0, %s49
      %s69 = sphi 0, %s71
      %s72 = sphi 0, %s69
      %s73 = sphi 0, %s72
      %s89 = sphi 0, %s73
      %s95 = sphi 0, %s97
      %s98 = sphi 0, %s95
      %s99 = sphi 0, %s98
      %s115 = sphi 0, %s99
      %s121 = sphi 0, %s123
      %s124 = sphi 0, %s121
      %s125 = sphi 0, %s124
      %s141 = sphi 0, %s125
      %s145 = sphi 0, %s145
      %s147 = sphi 0, %s145
      %s148 = sphi 0, %s147
      %s162 = sphi 0, %s148
    $region4: #{representation_forward.1} parent=1 // loop_header_branch
      %20 = sbr.rel (%p18) target = $region8
    $region5: #{representation_forward.1} parent=1 // loop_body
      %s22 = ssub.s32 %s17, 1
      %s23 = ssub.s32 %s17, 2
      %s24 = sadd.s32 %s17, 1
      %s26 = sadd.s32 %s25, 1
      %p29 = scmp.eq.s32.totalorder %s17, 9
      %p30 = scmp.ne.s32.totalorder %s25, %s27
      %p31 = scmp.eq.s32.totalorder %s17, 0
      %p32 = por %p30, %p31
      %p33 = scmp.ne.s32.totalorder %s25, %s27
      %p34 = scmp.eq.s32.totalorder %s22, 9
      %p35 = por %p33, %p34
      %p36 = scmp.ne.s32.totalorder %s27, %s28
      %p37 = scmp.eq.s32.totalorder %s22, 0
      %p38 = por %p36, %p37
      %p39 = scmp.ne.s32.totalorder %s27, %s28
      %p40 = scmp.eq.s32.totalorder %s23, 9
      %p41 = por %p39, %p40
      %p43 = scmp.ne.s32.totalorder %s28, %s42
      %p44 = scmp.eq.s32.totalorder %s23, 0
      %p45 = por %p43, %p44
      %s47 = sadd.s32 %s46, 1
      %p50 = scmp.eq.s32.totalorder %s17, 9
      %p51 = scmp.ne.s32.totalorder %s46, %s48
      %p52 = scmp.eq.s32.totalorder %s17, 0
      %p53 = por %p51, %p52
      %p54 = scmp.ne.s32.totalorder %s46, %s48
      %p55 = scmp.eq.s32.totalorder %s22, 9
      %p56 = por %p54, %p55
      %p57 = scmp.ne.s32.totalorder %s48, %s49
      %p58 = scmp.eq.s32.totalorder %s22, 0
      %p59 = por %p57, %p58
      %p60 = scmp.ne.s32.totalorder %s48, %s49
      %p61 = scmp.eq.s32.totalorder %s23, 9
      %p62 = por %p60, %p61
      %p64 = scmp.ne.s32.totalorder %s49, %s63
      %p65 = scmp.eq.s32.totalorder %s23, 0
      %p66 = por %p64, %p65
      %s67 = ssub.s32 %s17, %s24
      %p68 = scmp.eq.s32.totalorder %s67, 0
      %s70 = sadd.s32 %s69, 1
      %s71 = scalar_select %p68, %s69, %s70
      %p74 = pneg %p68
      %p75 = scmp.eq.s32.totalorder %s17, 9
      %p76 = por %p74, %p75
      %p77 = scmp.ne.s32.totalorder %s69, %s72
      %p78 = scmp.eq.s32.totalorder %s17, 0
      %p79 = por %p77, %p78
      %p80 = scmp.ne.s32.totalorder %s69, %s72
      %p81 = scmp.eq.s32.totalorder %s22, 9
      %p82 = por %p80, %p81
      %p83 = scmp.ne.s32.totalorder %s72, %s73
      %p84 = scmp.eq.s32.totalorder %s22, 0
      %p85 = por %p83, %p84
      %p86 = scmp.ne.s32.totalorder %s72, %s73
      %p87 = scmp.eq.s32.totalorder %s23, 9
      %p88 = por %p86, %p87
      %p90 = scmp.ne.s32.totalorder %s73, %s89
      %p91 = scmp.eq.s32.totalorder %s23, 0
      %p92 = por %p90, %p91
      %s93 = ssub.s32 %s17, %s24
      %p94 = scmp.eq.s32.totalorder %s93, 0
      %s96 = sadd.s32 %s95, 1
      %s97 = scalar_select %p94, %s95, %s96
      %p100 = pneg %p94
      %p101 = scmp.eq.s32.totalorder %s17, 9
      %p102 = por %p100, %p101
      %p103 = scmp.ne.s32.totalorder %s95, %s98
      %p104 = scmp.eq.s32.totalorder %s17, 0
      %p105 = por %p103, %p104
      %p106 = scmp.ne.s32.totalorder %s95, %s98
      %p107 = scmp.eq.s32.totalorder %s22, 9
      %p108 = por %p106, %p107
      %p109 = scmp.ne.s32.totalorder %s98, %s99
      %p110 = scmp.eq.s32.totalorder %s22, 0
      %p111 = por %p109, %p110
      %p112 = scmp.ne.s32.totalorder %s98, %s99
      %p113 = scmp.eq.s32.totalorder %s23, 9
      %p114 = por %p112, %p113
      %p116 = scmp.ne.s32.totalorder %s99, %s115
      %p117 = scmp.eq.s32.totalorder %s23, 0
      %p118 = por %p116, %p117
      %s119 = ssub.s32 %s17, %s24
      %p120 = scmp.eq.s32.totalorder %s119, 0
      %s122 = sadd.s32 %s121, 1
      %s123 = scalar_select %p120, %s121, %s122
      %p126 = pneg %p120
      %p127 = scmp.eq.s32.totalorder %s17, 9
      %p128 = por %p126, %p127
      %p129 = scmp.ne.s32.totalorder %s121, %s124
      %p130 = scmp.eq.s32.totalorder %s17, 0
      %p131 = por %p129, %p130
      %p132 = scmp.ne.s32.totalorder %s121, %s124
      %p133 = scmp.eq.s32.totalorder %s22, 9
      %p134 = por %p132, %p133
      %p135 = scmp.ne.s32.totalorder %s124, %s125
      %p136 = scmp.eq.s32.totalorder %s22, 0
      %p137 = por %p135, %p136
      %p138 = scmp.ne.s32.totalorder %s124, %s125
      %p139 = scmp.eq.s32.totalorder %s23, 9
      %p140 = por %p138, %p139
      %p142 = scmp.ne.s32.totalorder %s125, %s141
      %p143 = scmp.eq.s32.totalorder %s23, 0
      %p144 = por %p142, %p143
      %s146 = sadd.s32 %s145, 1
      %p149 = scmp.eq.s32.totalorder %s17, 9
      %p150 = scmp.ne.s32.totalorder %s145, %s147
      %p151 = scmp.eq.s32.totalorder %s17, 0
      %p152 = por %p150, %p151
      %p153 = scmp.ne.s32.totalorder %s145, %s147
      %p154 = scmp.eq.s32.totalorder %s22, 9
      %p155 = por %p153, %p154
      %p156 = scmp.ne.s32.totalorder %s147, %s148
      %p157 = scmp.eq.s32.totalorder %s22, 0
      %p158 = por %p156, %p157
      %p159 = scmp.ne.s32.totalorder %s147, %s148
      %p160 = scmp.eq.s32.totalorder %s23, 9
      %p161 = por %p159, %p160
      %p163 = scmp.ne.s32.totalorder %s148, %s162
      %p164 = scmp.eq.s32.totalorder %s23, 0
      %p165 = por %p163, %p164
      %p166 = scmp.le.s32.totalorder 1, %s17
      %p167 = scmp.lt.s32.totalorder %s17, 11
      %p168 = pnand %p166, %p167
      %p169 = pneg %p168
      // Predicated region
      $region9: #{representation_forward.1} parent=5 // pred_check
        _
      $region10: #{representation_forward.1} parent=5 // pred_check_branch
        %171 = sbr.rel (%p168) target = $region12
      $region11: #{representation_forward.1} parent=5 // pred_region
        %s172 = ssub.s32 %s17, 1
        // Predicated region
        $region13: #{representation_forward.1} parent=11 // pred_check
          %p173 = pneg %p38
        $region14: #{representation_forward.1} parent=11 // pred_check_branch
          %175 = sbr.rel (%p173) target = $region16
        $region15: #{representation_forward.1} parent=11 // pred_region
          _
        $region16: #{representation_forward.1} parent=11 // pred_fallthru
          _
        // Predicated region
        $region17: #{representation_forward.1} parent=11 // pred_check
          %p176 = pneg %p59
        $region18: #{representation_forward.1} parent=11 // pred_check_branch
          %178 = sbr.rel (%p176) target = $region20
        $region19: #{representation_forward.1} parent=11 // pred_region
          _
        $region20: #{representation_forward.1} parent=11 // pred_fallthru
          _
      $region12: #{representation_forward.1} parent=5 // pred_fallthru
        _
      %p179 = scmp.lt.s32.totalorder %s17, 10
      // Predicated region
      $region21: #{representation_forward.1} parent=5 // pred_check
        %p180 = pneg %p179
      $region22: #{representation_forward.1} parent=5 // pred_check_branch
        %182 = sbr.rel (%p180) target = $region24
      $region23: #{representation_forward.1} parent=5 // pred_region
        // Predicated region
        $region25: #{representation_forward.1} parent=23 // pred_check
          %p183 = pneg %p79
        $region26: #{representation_forward.1} parent=23 // pred_check_branch
          %185 = sbr.rel (%p183) target = $region28
        $region27: #{representation_forward.1} parent=23 // pred_region
          %s186 = sand.u32 %s69, 1
          %s187 = scalar_lea.sflag [#allocation5], %s186
          %s188 = sand.u32 %s69, 1
          %s189 = smul.addr %s188, 576
          %s190 = scalar_lea.vmem [#allocation4], %s189
          %s192 = ssub.s32 9216, 9216
          %193 = vsyncadd %s187, %s192
          %s194 = smul.addr %s17, 144
          %s195 = smul.addr %s194, 64
          %s196 = scalar_lea.hbm %s2, %s195
          %s197 = sshll.u32 %s190, 4
          %s198 = int_to_ptr.vmem [resolvable:$true] %s197
          %203 = dma.hbm_to_vmem [thread:$0]  %s196, 9216, %s198, %s187, 64, 64, 4
        $region28: #{representation_forward.1} parent=23 // pred_fallthru
          _
        // Predicated region
        $region29: #{representation_forward.1} parent=23 // pred_check
          %p204 = pneg %p105
        $region30: #{representation_forward.1} parent=23 // pred_check_branch
          %206 = sbr.rel (%p204) target = $region32
        $region31: #{representation_forward.1} parent=23 // pred_region
          %s207 = sand.u32 %s17, 1
          %s208 = scalar_lea.sflag [#allocation7], %s207
          %s209 = sand.u32 %s95, 1
          %s210 = scalar_lea.vmem [#allocation6], %s209
          %s212 = ssub.s32 16, 16
          %213 = vsyncadd %s208, %s212
          %s214 = smul.addr %s17, 16
          %s215 = scalar_lea.hbm %s3, %s214
          %s217 = sshll.u32 %s210, 4
          %s218 = int_to_ptr.vmem [resolvable:$true] %s217
          %220 = dma.hbm_to_vmem [thread:$0]  %s215, 16, %s218, %s208
        $region32: #{representation_forward.1} parent=23 // pred_fallthru
          _
        // Predicated region
        $region33: #{representation_forward.1} parent=23 // pred_check
          %p221 = pneg %p131
        $region34: #{representation_forward.1} parent=23 // pred_check_branch
          %223 = sbr.rel (%p221) target = $region36
        $region35: #{representation_forward.1} parent=23 // pred_region
          %s224 = sand.u32 %s17, 1
          %s225 = scalar_lea.sflag [#allocation7], %s224
          %s226 = sand.u32 %s121, 1
          %s227 = scalar_lea.vmem [#allocation8], %s226
          %s229 = ssub.s32 16, 16
          %230 = vsyncadd %s225, %s229
          %s231 = smul.addr %s17, 16
          %s232 = scalar_lea.hbm %s4, %s231
          %s234 = sshll.u32 %s227, 4
          %s235 = int_to_ptr.vmem [resolvable:$true] %s234
          %237 = dma.hbm_to_vmem [thread:$0]  %s232, 16, %s235, %s225
        $region36: #{representation_forward.1} parent=23 // pred_fallthru
          _
      $region24: #{representation_forward.1} parent=5 // pred_fallthru
        _
      %p238 = scmp.le.s32.totalorder 1, %s17
      %p239 = scmp.lt.s32.totalorder %s17, 11
      %p240 = pnand %p238, %p239
      %p241 = pneg %p240
      // Predicated region
      $region37: #{representation_forward.1} parent=5 // pred_check
        _
      $region38: #{representation_forward.1} parent=5 // pred_check_branch
        %243 = sbr.rel (%p240) target = $region40
      $region39: #{representation_forward.1} parent=5 // pred_region
        %s244 = ssub.s32 %s17, 1
        %s245 = sand.u32 %s72, 1
        %s246 = scalar_lea.sflag [#allocation5], %s245
        %s247 = sand.u32 %s72, 1
        %s248 = smul.addr %s247, 576
        %s249 = scalar_lea.vmem [#allocation4], %s248
        // Predicated region
        $region41: #{representation_forward.1} parent=39 // pred_check
          %p250 = pneg %p85
        $region42: #{representation_forward.1} parent=39 // pred_check_branch
          %252 = sbr.rel (%p250) target = $region44
        $region43: #{representation_forward.1} parent=39 // pred_region
          %253 = dma.done %s246, 9216
        $region44: #{representation_forward.1} parent=39 // pred_fallthru
          _
        %s254 = sand.u32 %s22, 1
        %s255 = scalar_lea.sflag [#allocation7], %s254
        %s256 = sand.u32 %s98, 1
        %s257 = scalar_lea.vmem [#allocation6], %s256
        // Predicated region
        $region45: #{representation_forward.1} parent=39 // pred_check
          %p258 = pneg %p111
        $region46: #{representation_forward.1} parent=39 // pred_check_branch
          %260 = sbr.rel (%p258) target = $region48
        $region47: #{representation_forward.1} parent=39 // pred_region
          %261 = dma.done %s255, 16
        $region48: #{representation_forward.1} parent=39 // pred_fallthru
          _
        %s262 = sand.u32 %s22, 1
        %s263 = scalar_lea.sflag [#allocation7], %s262
        %s264 = sand.u32 %s124, 1
        %s265 = scalar_lea.vmem [#allocation8], %s264
        // Predicated region
        $region49: #{representation_forward.1} parent=39 // pred_check
          %p266 = pneg %p137
        $region50: #{representation_forward.1} parent=39 // pred_check_branch
          %268 = sbr.rel (%p266) target = $region52
        $region51: #{representation_forward.1} parent=39 // pred_region
          %269 = dma.done %s263, 16
        $region52: #{representation_forward.1} parent=39 // pred_fallthru
          _
        %p270 = pneg %p38
        %p271 = pneg %p35
        %p272 = pneg %p59
        %p273 = pneg %p56
        %s274 = sand.u32 %s72, 1
        %s275 = scalar_lea.sflag [#allocation5], %s274
        %s276 = sand.u32 %s72, 1
        %s277 = smul.addr %s276, 576
        %s278 = scalar_lea.vmem [#allocation4], %s277
        %p279 = pneg %p85
        %p280 = pneg %p82
        %s281 = sand.u32 %s22, 1
        %s282 = scalar_lea.sflag [#allocation7], %s281
        %s283 = sand.u32 %s98, 1
        %s284 = scalar_lea.vmem [#allocation6], %s283
        %p285 = pneg %p111
        %p286 = pneg %p108
        %s287 = sand.u32 %s22, 1
        %s288 = scalar_lea.sflag [#allocation7], %s287
        %s289 = sand.u32 %s124, 1
        %s290 = scalar_lea.vmem [#allocation8], %s289
        %p291 = pneg %p137
        %p292 = pneg %p134
        %p293 = pneg %p158
        %p294 = pneg %p155
        %p296 = scmp.eq.s32.totalorder %s22, 0
        // Predicated region
        $region53: #{representation_forward.1} parent=39 // pred_check
          %p297 = pneg %p296
        $region54: #{representation_forward.1} parent=39 // pred_check_branch
          %299 = sbr.rel (%p297) target = $region56
        $region55: #{representation_forward.1} parent=39 // pred_region
          %300 = vst [vmem:[#allocation2] sm:$0xff] 0.0
          %301 = vst [vmem:[#allocation2 + $0x8] sm:$0xff] 0.0
          %302 = vst [vmem:[#allocation2 + $0x10] sm:$0xff] 0.0
          %303 = vst [vmem:[#allocation2 + $0x18] sm:$0xff] 0.0
          %304 = vst [vmem:[#allocation2 + $0x20] sm:$0xff] 0.0
          %305 = vst [vmem:[#allocation2 + $0x28] sm:$0xff] 0.0
          %306 = vst [vmem:[#allocation2 + $0x30] sm:$0xff] 0.0
          %307 = vst [vmem:[#allocation2 + $0x38] sm:$0xff] 0.0
          %308 = vst [vmem:[#allocation2 + $0x40] sm:$0xff] 0.0
          %309 = vst [vmem:[#allocation2 + $0x48] sm:$0xff] 0.0
          %310 = vst [vmem:[#allocation2 + $0x50] sm:$0xff] 0.0
          %311 = vst [vmem:[#allocation2 + $0x58] sm:$0xff] 0.0
          %312 = vst [vmem:[#allocation2 + $0x60] sm:$0xff] 0.0
          %313 = vst [vmem:[#allocation2 + $0x68] sm:$0xff] 0.0
          %314 = vst [vmem:[#allocation2 + $0x70] sm:$0xff] 0.0
          %315 = vst [vmem:[#allocation2 + $0x78] sm:$0xff] 0.0
          %316 = vst [vmem:[#allocation2 + $0x80] sm:$0xff] 0.0
          %317 = vst [vmem:[#allocation2 + $0x88] sm:$0xff] 0.0
          %318 = vst [vmem:[#allocation2 + $0x90] sm:$0xff] 0.0
          %319 = vst [vmem:[#allocation2 + $0x98] sm:$0xff] 0.0
          %v320 = vld [vmem:[%s0] sm:$0xff]
          %v321 = vld [vmem:[%s0 + $0x8] sm:$0xff]
          %v322 = vld [vmem:[%s0 + $0x10] sm:$0xff]
          %v323 = vld [vmem:[%s0 + $0x18] sm:$0xff]
          %v324 = vld [vmem:[%s0 + $0x20] sm:$0xff]
          %v325 = vld [vmem:[%s0 + $0x28] sm:$0xff]
          %v326 = vld [vmem:[%s0 + $0x30] sm:$0xff]
          %v327 = vld [vmem:[%s0 + $0x38] sm:$0xff]
          %v328 = vld [vmem:[%s0 + $0x40] sm:$0xff]
          %v329 = vld [vmem:[%s0 + $0x48] sm:$0xff]
          %v330 = vld [vmem:[%s0 + $0x50] sm:$0xff]
          %v331 = vld [vmem:[%s0 + $0x58] sm:$0xff]
          %v332 = vld [vmem:[%s0 + $0x60] sm:$0xff]
          %v333 = vld [vmem:[%s0 + $0x68] sm:$0xff]
          %v334 = vld [vmem:[%s0 + $0x70] sm:$0xff]
          %v335 = vld [vmem:[%s0 + $0x78] sm:$0xff]
          %v336 = vld [vmem:[%s0 + $0x80] sm:$0xff]
          %v337 = vld [vmem:[%s0 + $0x88] sm:$0xff]
          %338 = vst [vmem:[#allocation2 + $0x8] sm:$0xff] %v320
          %339 = vst [vmem:[#allocation2 + $0x10] sm:$0xff] %v321
          %340 = vst [vmem:[#allocation2 + $0x18] sm:$0xff] %v322
          %341 = vst [vmem:[#allocation2 + $0x20] sm:$0xff] %v323
          %342 = vst [vmem:[#allocation2 + $0x28] sm:$0xff] %v324
          %343 = vst [vmem:[#allocation2 + $0x30] sm:$0xff] %v325
          %344 = vst [vmem:[#allocation2 + $0x38] sm:$0xff] %v326
          %345 = vst [vmem:[#allocation2 + $0x40] sm:$0xff] %v327
          %346 = vst [vmem:[#allocation2 + $0x48] sm:$0xff] %v328
          %347 = vst [vmem:[#allocation2 + $0x50] sm:$0xff] %v329
          %348 = vst [vmem:[#allocation2 + $0x58] sm:$0xff] %v330
          %349 = vst [vmem:[#allocation2 + $0x60] sm:$0xff] %v331
          %350 = vst [vmem:[#allocation2 + $0x68] sm:$0xff] %v332
          %351 = vst [vmem:[#allocation2 + $0x70] sm:$0xff] %v333
          %352 = vst [vmem:[#allocation2 + $0x78] sm:$0xff] %v334
          %353 = vst [vmem:[#allocation2 + $0x80] sm:$0xff] %v335
          %354 = vst [vmem:[#allocation2 + $0x88] sm:$0xff] %v336
          %355 = vst [vmem:[#allocation2 + $0x90] sm:$0xff] %v337
          %356 = vst [vmem:[#allocation3] sm:$0xff] 0.0
          %357 = vst [vmem:[#allocation3 + $0x8] sm:$0xff] 0.0
          %358 = vst [vmem:[#allocation3 + $0x10] sm:$0xff] 0.0
          %359 = vst [vmem:[#allocation3 + $0x18] sm:$0xff] 0.0
          %360 = vst [vmem:[#allocation3 + $0x20] sm:$0xff] 0.0
          %361 = vst [vmem:[#allocation3 + $0x28] sm:$0xff] 0.0
          %362 = vst [vmem:[#allocation3 + $0x30] sm:$0xff] 0.0
          %363 = vst [vmem:[#allocation3 + $0x38] sm:$0xff] 0.0
          %364 = vst [vmem:[#allocation3 + $0x40] sm:$0xff] 0.0
          %365 = vst [vmem:[#allocation3 + $0x48] sm:$0xff] 0.0
          %366 = vst [vmem:[#allocation3 + $0x50] sm:$0xff] 0.0
          %367 = vst [vmem:[#allocation3 + $0x58] sm:$0xff] 0.0
          %368 = vst [vmem:[#allocation3 + $0x60] sm:$0xff] 0.0
          %369 = vst [vmem:[#allocation3 + $0x68] sm:$0xff] 0.0
          %370 = vst [vmem:[#allocation3 + $0x70] sm:$0xff] 0.0
          %371 = vst [vmem:[#allocation3 + $0x78] sm:$0xff] 0.0
          %372 = vst [vmem:[#allocation3 + $0x80] sm:$0xff] 0.0
          %373 = vst [vmem:[#allocation3 + $0x88] sm:$0xff] 0.0
        $region56: #{representation_forward.1} parent=39 // pred_fallthru
          _
        %p374 = scmp.lt.s32.totalorder %s22, 0
        %s375 = ssub.s32 0, %s22
        %s376 = scalar_select %p374, %s375, %s22
        %s377 = sand.u32 %s376, 1
        %s378 = ssub.s32 0, %s377
        %s379 = scalar_select %p374, %s378, %s377
        %p380 = scmp.ne.s32.totalorder %s379, 0
        %p381 = scmp.lt.s32.totalorder %s379, 0
        %p382 = pnand %p381, %p380
        %p383 = pneg %p382
        %s384 = sadd.s32 %s379, 2
        %s385 = scalar_select %p383, %s384, %s379
        %p386 = scmp.eq.s32.totalorder %s385, 1
        %p387 = scmp.lt.s32.totalorder %s22, 9
        %p388 = pnand %p386, %p387
        %p389 = pneg %p388
        // Predicated region
        $region57: #{representation_forward.1} parent=39 // pred_check
          _
        $region58: #{representation_forward.1} parent=39 // pred_check_branch
          %391 = sbr.rel (%p388) target = $region60
        $region59: #{representation_forward.1} parent=39 // pred_region
          %v392 = vld [vmem:[#allocation2 + $0x8] sm:$0xff]
          %v393 = vld [vmem:[#allocation2 + $0x10] sm:$0xff]
          %v394 = vld [vmem:[#allocation2 + $0x18] sm:$0xff]
          %v395 = vld [vmem:[#allocation2 + $0x20] sm:$0xff]
          %v396 = vld [vmem:[#allocation2 + $0x28] sm:$0xff]
          %v397 = vld [vmem:[#allocation2 + $0x30] sm:$0xff]
          %v398 = vld [vmem:[#allocation2 + $0x38] sm:$0xff]
          %v399 = vld [vmem:[#allocation2 + $0x40] sm:$0xff]
          %v400 = vld [vmem:[#allocation2 + $0x48] sm:$0xff]
          %v401 = vld [vmem:[#allocation2 + $0x50] sm:$0xff]
          %v402 = vld [vmem:[#allocation2 + $0x58] sm:$0xff]
          %v403 = vld [vmem:[#allocation2 + $0x60] sm:$0xff]
          %v404 = vld [vmem:[#allocation2 + $0x68] sm:$0xff]
          %v405 = vld [vmem:[#allocation2 + $0x70] sm:$0xff]
          %v406 = vld [vmem:[#allocation2 + $0x78] sm:$0xff]
          %v407 = vld [vmem:[#allocation2 + $0x80] sm:$0xff]
          %v408 = vld [vmem:[#allocation2 + $0x88] sm:$0xff]
          %v409 = vld [vmem:[#allocation2 + $0x90] sm:$0xff]
          %410 = vst [vmem:[#allocation3] sm:$0xff] %v392
          %411 = vst [vmem:[#allocation3 + $0x8] sm:$0xff] %v393
          %412 = vst [vmem:[#allocation3 + $0x10] sm:$0xff] %v394
          %413 = vst [vmem:[#allocation3 + $0x18] sm:$0xff] %v395
          %414 = vst [vmem:[#allocation3 + $0x20] sm:$0xff] %v396
          %415 = vst [vmem:[#allocation3 + $0x28] sm:$0xff] %v397
          %416 = vst [vmem:[#allocation3 + $0x30] sm:$0xff] %v398
          %417 = vst [vmem:[#allocation3 + $0x38] sm:$0xff] %v399
          %418 = vst [vmem:[#allocation3 + $0x40] sm:$0xff] %v400
          %419 = vst [vmem:[#allocation3 + $0x48] sm:$0xff] %v401
          %420 = vst [vmem:[#allocation3 + $0x50] sm:$0xff] %v402
          %421 = vst [vmem:[#allocation3 + $0x58] sm:$0xff] %v403
          %422 = vst [vmem:[#allocation3 + $0x60] sm:$0xff] %v404
          %423 = vst [vmem:[#allocation3 + $0x68] sm:$0xff] %v405
          %424 = vst [vmem:[#allocation3 + $0x70] sm:$0xff] %v406
          %425 = vst [vmem:[#allocation3 + $0x78] sm:$0xff] %v407
          %426 = vst [vmem:[#allocation3 + $0x80] sm:$0xff] %v408
          %427 = vst [vmem:[#allocation3 + $0x88] sm:$0xff] %v409
        $region60: #{representation_forward.1} parent=39 // pred_fallthru
          _
        %v428 = vld [vmem:[%s1] sm:$0xff]
        %v429 = vld [vmem:[%s1 + $0x8] sm:$0xff]
        %v430 = vld [vmem:[%s1 + $0x10] sm:$0xff]
        %v431 = vld [vmem:[%s1 + $0x18] sm:$0xff]
        %v432 = vld [vmem:[%s1 + $0x20] sm:$0xff]
        %v433 = vld [vmem:[%s1 + $0x28] sm:$0xff]
        %v434 = vld [vmem:[%s1 + $0x30] sm:$0xff]
        %v435 = vld [vmem:[%s1 + $0x38] sm:$0xff]
        %v436 = vld [vmem:[%s1 + $0x40] sm:$0xff]
        %v437 = vld [vmem:[%s1 + $0x48] sm:$0xff]
        %v438 = vld [vmem:[%s1 + $0x50] sm:$0xff]
        %v439 = vld [vmem:[%s1 + $0x58] sm:$0xff]
        %v440 = vld [vmem:[%s1 + $0x60] sm:$0xff]
        %v441 = vld [vmem:[%s1 + $0x68] sm:$0xff]
        %v442 = vld [vmem:[%s1 + $0x70] sm:$0xff]
        %v443 = vld [vmem:[%s1 + $0x78] sm:$0xff]
        %v444 = vld [vmem:[%s1 + $0x80] sm:$0xff]
        %v445 = vld [vmem:[%s1 + $0x88] sm:$0xff]
        %v446 = vld [vmem:[#allocation2 + $0x4] sm:$0xff]
        %v447 = vld [vmem:[#allocation2 + $0xc] sm:$0xff]
        %v448 = vld [vmem:[#allocation2 + $0x14] sm:$0xff]
        %v449 = vld [vmem:[#allocation2 + $0x1c] sm:$0xff]
        %v450 = vld [vmem:[#allocation2 + $0x24] sm:$0xff]
        %v451 = vld [vmem:[#allocation2 + $0x2c] sm:$0xff]
        %v452 = vld [vmem:[#allocation2 + $0x34] sm:$0xff]
        %v453 = vld [vmem:[#allocation2 + $0x3c] sm:$0xff]
        %v454 = vld [vmem:[#allocation2 + $0x44] sm:$0xff]
        %v455 = vld [vmem:[#allocation2 + $0x4c] sm:$0xff]
        %v456 = vld [vmem:[#allocation2 + $0x54] sm:$0xff]
        %v457 = vld [vmem:[#allocation2 + $0x5c] sm:$0xff]
        %v458 = vld [vmem:[#allocation2 + $0x64] sm:$0xff]
        %v459 = vld [vmem:[#allocation2 + $0x6c] sm:$0xff]
        %v460 = vld [vmem:[#allocation2 + $0x74] sm:$0xff]
        %v461 = vld [vmem:[#allocation2 + $0x7c] sm:$0xff]
        %v462 = vld [vmem:[#allocation2 + $0x84] sm:$0xff]
        %v463 = vld [vmem:[#allocation2 + $0x8c] sm:$0xff]
        %465 = vset.pattern.permute.xlu0 0
        %466 = vperm.xlu0 %465, %v428
        %v467 = vpop.permute.xlu0 %466
        %470 = vset.pattern.permute.xlu0 0
        %471 = vperm.xlu0 %470, %v429
        %v472 = vpop.permute.xlu0 %471
        %475 = vset.pattern.permute.xlu0 0
        %476 = vperm.xlu0 %475, %v430
        %v477 = vpop.permute.xlu0 %476
        %480 = vset.pattern.permute.xlu0 0
        %481 = vperm.xlu0 %480, %v431
        %v482 = vpop.permute.xlu0 %481
        %485 = vset.pattern.permute.xlu0 0
        %486 = vperm.xlu0 %485, %v432
        %v487 = vpop.permute.xlu0 %486
        %490 = vset.pattern.permute.xlu0 0
        %491 = vperm.xlu0 %490, %v433
        %v492 = vpop.permute.xlu0 %491
        %495 = vset.pattern.permute.xlu0 0
        %496 = vperm.xlu0 %495, %v434
        %v497 = vpop.permute.xlu0 %496
        %500 = vset.pattern.permute.xlu0 0
        %501 = vperm.xlu0 %500, %v435
        %v502 = vpop.permute.xlu0 %501
        %505 = vset.pattern.permute.xlu0 0
        %506 = vperm.xlu0 %505, %v436
        %v507 = vpop.permute.xlu0 %506
        %510 = vset.pattern.permute.xlu0 0
        %511 = vperm.xlu0 %510, %v437
        %v512 = vpop.permute.xlu0 %511
        %515 = vset.pattern.permute.xlu0 0
        %516 = vperm.xlu0 %515, %v438
        %v517 = vpop.permute.xlu0 %516
        %520 = vset.pattern.permute.xlu0 0
        %521 = vperm.xlu0 %520, %v439
        %v522 = vpop.permute.xlu0 %521
        %525 = vset.pattern.permute.xlu0 0
        %526 = vperm.xlu0 %525, %v440
        %v527 = vpop.permute.xlu0 %526
        %530 = vset.pattern.permute.xlu0 0
        %531 = vperm.xlu0 %530, %v441
        %v532 = vpop.permute.xlu0 %531
        %535 = vset.pattern.permute.xlu0 0
        %536 = vperm.xlu0 %535, %v442
        %v537 = vpop.permute.xlu0 %536
        %540 = vset.pattern.permute.xlu0 0
        %541 = vperm.xlu0 %540, %v443
        %v542 = vpop.permute.xlu0 %541
        %545 = vset.pattern.permute.xlu0 0
        %546 = vperm.xlu0 %545, %v444
        %v547 = vpop.permute.xlu0 %546
        %550 = vset.pattern.permute.xlu0 0
        %551 = vperm.xlu0 %550, %v445
        %v552 = vpop.permute.xlu0 %551
        %v554 = vmul.f32 %v446, %v467
        %v555 = vmul.f32 %v447, %v472
        %v556 = vmul.f32 %v448, %v477
        %v557 = vmul.f32 %v449, %v482
        %v558 = vmul.f32 %v450, %v487
        %v559 = vmul.f32 %v451, %v492
        %v560 = vmul.f32 %v452, %v497
        %v561 = vmul.f32 %v453, %v502
        %v562 = vmul.f32 %v454, %v507
        %v563 = vmul.f32 %v455, %v512
        %v564 = vmul.f32 %v456, %v517
        %v565 = vmul.f32 %v457, %v522
        %v566 = vmul.f32 %v458, %v527
        %v567 = vmul.f32 %v459, %v532
        %v568 = vmul.f32 %v460, %v537
        %v569 = vmul.f32 %v461, %v542
        %v570 = vmul.f32 %v462, %v547
        %v571 = vmul.f32 %v463, %v552
        %v572 = vpack.c.bf16 %v555, %v554
        %v573 = vpack.c.bf16 %v557, %v556
        %v574 = vpack.c.bf16 %v559, %v558
        %v575 = vpack.c.bf16 %v561, %v560
        %v576 = vpack.c.bf16 %v563, %v562
        %v577 = vpack.c.bf16 %v565, %v564
        %v578 = vpack.c.bf16 %v567, %v566
        %v579 = vpack.c.bf16 %v569, %v568
        %v580 = vpack.c.bf16 %v571, %v570
        %v581 = vld [vmem:[#allocation2 + $0x5] sm:$0xff]
        %v582 = vld [vmem:[#allocation2 + $0xd] sm:$0xff]
        %v583 = vld [vmem:[#allocation2 + $0x15] sm:$0xff]
        %v584 = vld [vmem:[#allocation2 + $0x1d] sm:$0xff]
        %v585 = vld [vmem:[#allocation2 + $0x25] sm:$0xff]
        %v586 = vld [vmem:[#allocation2 + $0x2d] sm:$0xff]
        %v587 = vld [vmem:[#allocation2 + $0x35] sm:$0xff]
        %v588 = vld [vmem:[#allocation2 + $0x3d] sm:$0xff]
        %v589 = vld [vmem:[#allocation2 + $0x45] sm:$0xff]
        %v590 = vld [vmem:[#allocation2 + $0x4d] sm:$0xff]
        %v591 = vld [vmem:[#allocation2 + $0x55] sm:$0xff]
        %v592 = vld [vmem:[#allocation2 + $0x5d] sm:$0xff]
        %v593 = vld [vmem:[#allocation2 + $0x65] sm:$0xff]
        %v594 = vld [vmem:[#allocation2 + $0x6d] sm:$0xff]
        %v595 = vld [vmem:[#allocation2 + $0x75] sm:$0xff]
        %v596 = vld [vmem:[#allocation2 + $0x7d] sm:$0xff]
        %v597 = vld [vmem:[#allocation2 + $0x85] sm:$0xff]
        %v598 = vld [vmem:[#allocation2 + $0x8d] sm:$0xff]
        %599 = vset.pattern.permute.xlu0 1
        %600 = vperm.xlu0 %599, %v428
        %v601 = vpop.permute.xlu0 %600
        %603 = vset.pattern.permute.xlu0 1
        %604 = vperm.xlu0 %603, %v429
        %v605 = vpop.permute.xlu0 %604
        %607 = vset.pattern.permute.xlu0 1
        %608 = vperm.xlu0 %607, %v430
        %v609 = vpop.permute.xlu0 %608
        %611 = vset.pattern.permute.xlu0 1
        %612 = vperm.xlu0 %611, %v431
        %v613 = vpop.permute.xlu0 %612
        %615 = vset.pattern.permute.xlu0 1
        %616 = vperm.xlu0 %615, %v432
        %v617 = vpop.permute.xlu0 %616
        %619 = vset.pattern.permute.xlu0 1
        %620 = vperm.xlu0 %619, %v433
        %v621 = vpop.permute.xlu0 %620
        %623 = vset.pattern.permute.xlu0 1
        %624 = vperm.xlu0 %623, %v434
        %v625 = vpop.permute.xlu0 %624
        %627 = vset.pattern.permute.xlu0 1
        %628 = vperm.xlu0 %627, %v435
        %v629 = vpop.permute.xlu0 %628
        %631 = vset.pattern.permute.xlu0 1
        %632 = vperm.xlu0 %631, %v436
        %v633 = vpop.permute.xlu0 %632
        %635 = vset.pattern.permute.xlu0 1
        %636 = vperm.xlu0 %635, %v437
        %v637 = vpop.permute.xlu0 %636
        %639 = vset.pattern.permute.xlu0 1
        %640 = vperm.xlu0 %639, %v438
        %v641 = vpop.permute.xlu0 %640
        %643 = vset.pattern.permute.xlu0 1
        %644 = vperm.xlu0 %643, %v439
        %v645 = vpop.permute.xlu0 %644
        %647 = vset.pattern.permute.xlu0 1
        %648 = vperm.xlu0 %647, %v440
        %v649 = vpop.permute.xlu0 %648
        %651 = vset.pattern.permute.xlu0 1
        %652 = vperm.xlu0 %651, %v441
        %v653 = vpop.permute.xlu0 %652
        %655 = vset.pattern.permute.xlu0 1
        %656 = vperm.xlu0 %655, %v442
        %v657 = vpop.permute.xlu0 %656
        %659 = vset.pattern.permute.xlu0 1
        %660 = vperm.xlu0 %659, %v443
        %v661 = vpop.permute.xlu0 %660
        %663 = vset.pattern.permute.xlu0 1
        %664 = vperm.xlu0 %663, %v444
        %v665 = vpop.permute.xlu0 %664
        %667 = vset.pattern.permute.xlu0 1
        %668 = vperm.xlu0 %667, %v445
        %v669 = vpop.permute.xlu0 %668
        %v671 = vmul.f32 %v581, %v601
        %v672 = vmul.f32 %v582, %v605
        %v673 = vmul.f32 %v583, %v609
        %v674 = vmul.f32 %v584, %v613
        %v675 = vmul.f32 %v585, %v617
        %v676 = vmul.f32 %v586, %v621
        %v677 = vmul.f32 %v587, %v625
        %v678 = vmul.f32 %v588, %v629
        %v679 = vmul.f32 %v589, %v633
        %v680 = vmul.f32 %v590, %v637
        %v681 = vmul.f32 %v591, %v641
        %v682 = vmul.f32 %v592, %v645
        %v683 = vmul.f32 %v593, %v649
        %v684 = vmul.f32 %v594, %v653
        %v685 = vmul.f32 %v595, %v657
        %v686 = vmul.f32 %v596, %v661
        %v687 = vmul.f32 %v597, %v665
        %v688 = vmul.f32 %v598, %v669
        %v689 = vpack.c.bf16 %v672, %v671
        %v690 = vpack.c.bf16 %v674, %v673
        %v691 = vpack.c.bf16 %v676, %v675
        %v692 = vpack.c.bf16 %v678, %v677
        %v693 = vpack.c.bf16 %v680, %v679
        %v694 = vpack.c.bf16 %v682, %v681
        %v695 = vpack.c.bf16 %v684, %v683
        %v696 = vpack.c.bf16 %v686, %v685
        %v697 = vpack.c.bf16 %v688, %v687
        %v698 = vld [vmem:[#allocation2 + $0x6] sm:$0xff]
        %v699 = vld [vmem:[#allocation2 + $0xe] sm:$0xff]
        %v700 = vld [vmem:[#allocation2 + $0x16] sm:$0xff]
        %v701 = vld [vmem:[#allocation2 + $0x1e] sm:$0xff]
        %v702 = vld [vmem:[#allocation2 + $0x26] sm:$0xff]
        %v703 = vld [vmem:[#allocation2 + $0x2e] sm:$0xff]
        %v704 = vld [vmem:[#allocation2 + $0x36] sm:$0xff]
        %v705 = vld [vmem:[#allocation2 + $0x3e] sm:$0xff]
        %v706 = vld [vmem:[#allocation2 + $0x46] sm:$0xff]
        %v707 = vld [vmem:[#allocation2 + $0x4e] sm:$0xff]
        %v708 = vld [vmem:[#allocation2 + $0x56] sm:$0xff]
        %v709 = vld [vmem:[#allocation2 + $0x5e] sm:$0xff]
        %v710 = vld [vmem:[#allocation2 + $0x66] sm:$0xff]
        %v711 = vld [vmem:[#allocation2 + $0x6e] sm:$0xff]
        %v712 = vld [vmem:[#allocation2 + $0x76] sm:$0xff]
        %v713 = vld [vmem:[#allocation2 + $0x7e] sm:$0xff]
        %v714 = vld [vmem:[#allocation2 + $0x86] sm:$0xff]
        %v715 = vld [vmem:[#allocation2 + $0x8e] sm:$0xff]
        %716 = vset.pattern.permute.xlu0 2
        %717 = vperm.xlu0 %716, %v428
        %v718 = vpop.permute.xlu0 %717
        %720 = vset.pattern.permute.xlu0 2
        %721 = vperm.xlu0 %720, %v429
        %v722 = vpop.permute.xlu0 %721
        %724 = vset.pattern.permute.xlu0 2
        %725 = vperm.xlu0 %724, %v430
        %v726 = vpop.permute.xlu0 %725
        %728 = vset.pattern.permute.xlu0 2
        %729 = vperm.xlu0 %728, %v431
        %v730 = vpop.permute.xlu0 %729
        %732 = vset.pattern.permute.xlu0 2
        %733 = vperm.xlu0 %732, %v432
        %v734 = vpop.permute.xlu0 %733
        %736 = vset.pattern.permute.xlu0 2
        %737 = vperm.xlu0 %736, %v433
        %v738 = vpop.permute.xlu0 %737
        %740 = vset.pattern.permute.xlu0 2
        %741 = vperm.xlu0 %740, %v434
        %v742 = vpop.permute.xlu0 %741
        %744 = vset.pattern.permute.xlu0 2
        %745 = vperm.xlu0 %744, %v435
        %v746 = vpop.permute.xlu0 %745
        %748 = vset.pattern.permute.xlu0 2
        %749 = vperm.xlu0 %748, %v436
        %v750 = vpop.permute.xlu0 %749
        %752 = vset.pattern.permute.xlu0 2
        %753 = vperm.xlu0 %752, %v437
        %v754 = vpop.permute.xlu0 %753
        %756 = vset.pattern.permute.xlu0 2
        %757 = vperm.xlu0 %756, %v438
        %v758 = vpop.permute.xlu0 %757
        %760 = vset.pattern.permute.xlu0 2
        %761 = vperm.xlu0 %760, %v439
        %v762 = vpop.permute.xlu0 %761
        %764 = vset.pattern.permute.xlu0 2
        %765 = vperm.xlu0 %764, %v440
        %v766 = vpop.permute.xlu0 %765
        %768 = vset.pattern.permute.xlu0 2
        %769 = vperm.xlu0 %768, %v441
        %v770 = vpop.permute.xlu0 %769
        %772 = vset.pattern.permute.xlu0 2
        %773 = vperm.xlu0 %772, %v442
        %v774 = vpop.permute.xlu0 %773
        %776 = vset.pattern.permute.xlu0 2
        %777 = vperm.xlu0 %776, %v443
        %v778 = vpop.permute.xlu0 %777
        %780 = vset.pattern.permute.xlu0 2
        %781 = vperm.xlu0 %780, %v444
        %v782 = vpop.permute.xlu0 %781
        %784 = vset.pattern.permute.xlu0 2
        %785 = vperm.xlu0 %784, %v445
        %v786 = vpop.permute.xlu0 %785
        %v788 = vmul.f32 %v698, %v718
        %v789 = vmul.f32 %v699, %v722
        %v790 = vmul.f32 %v700, %v726
        %v791 = vmul.f32 %v701, %v730
        %v792 = vmul.f32 %v702, %v734
        %v793 = vmul.f32 %v703, %v738
        %v794 = vmul.f32 %v704, %v742
        %v795 = vmul.f32 %v705, %v746
        %v796 = vmul.f32 %v706, %v750
        %v797 = vmul.f32 %v707, %v754
        %v798 = vmul.f32 %v708, %v758
        %v799 = vmul.f32 %v709, %v762
        %v800 = vmul.f32 %v710, %v766
        %v801 = vmul.f32 %v711, %v770
        %v802 = vmul.f32 %v712, %v774
        %v803 = vmul.f32 %v713, %v778
        %v804 = vmul.f32 %v714, %v782
        %v805 = vmul.f32 %v715, %v786
        %v806 = vpack.c.bf16 %v789, %v788
        %v807 = vpack.c.bf16 %v791, %v790
        %v808 = vpack.c.bf16 %v793, %v792
        %v809 = vpack.c.bf16 %v795, %v794
        %v810 = vpack.c.bf16 %v797, %v796
        %v811 = vpack.c.bf16 %v799, %v798
        %v812 = vpack.c.bf16 %v801, %v800
        %v813 = vpack.c.bf16 %v803, %v802
        %v814 = vpack.c.bf16 %v805, %v804
        %v815 = vld [vmem:[#allocation2 + $0x7] sm:$0xff]
        %v816 = vld [vmem:[#allocation2 + $0xf] sm:$0xff]
        %v817 = vld [vmem:[#allocation2 + $0x17] sm:$0xff]
        %v818 = vld [vmem:[#allocation2 + $0x1f] sm:$0xff]
        %v819 = vld [vmem:[#allocation2 + $0x27] sm:$0xff]
        %v820 = vld [vmem:[#allocation2 + $0x2f] sm:$0xff]
        %v821 = vld [vmem:[#allocation2 + $0x37] sm:$0xff]
        %v822 = vld [vmem:[#allocation2 + $0x3f] sm:$0xff]
        %v823 = vld [vmem:[#allocation2 + $0x47] sm:$0xff]
        %v824 = vld [vmem:[#allocation2 + $0x4f] sm:$0xff]
        %v825 = vld [vmem:[#allocation2 + $0x57] sm:$0xff]
        %v826 = vld [vmem:[#allocation2 + $0x5f] sm:$0xff]
        %v827 = vld [vmem:[#allocation2 + $0x67] sm:$0xff]
        %v828 = vld [vmem:[#allocation2 + $0x6f] sm:$0xff]
        %v829 = vld [vmem:[#allocation2 + $0x77] sm:$0xff]
        %v830 = vld [vmem:[#allocation2 + $0x7f] sm:$0xff]
        %v831 = vld [vmem:[#allocation2 + $0x87] sm:$0xff]
        %v832 = vld [vmem:[#allocation2 + $0x8f] sm:$0xff]
        %833 = vset.pattern.permute.xlu0 3
        %834 = vperm.xlu0 %833, %v428
        %v835 = vpop.permute.xlu0 %834
        %837 = vset.pattern.permute.xlu0 3
        %838 = vperm.xlu0 %837, %v429
        %v839 = vpop.permute.xlu0 %838
        %841 = vset.pattern.permute.xlu0 3
        %842 = vperm.xlu0 %841, %v430
        %v843 = vpop.permute.xlu0 %842
        %845 = vset.pattern.permute.xlu0 3
        %846 = vperm.xlu0 %845, %v431
        %v847 = vpop.permute.xlu0 %846
        %849 = vset.pattern.permute.xlu0 3
        %850 = vperm.xlu0 %849, %v432
        %v851 = vpop.permute.xlu0 %850
        %853 = vset.pattern.permute.xlu0 3
        %854 = vperm.xlu0 %853, %v433
        %v855 = vpop.permute.xlu0 %854
        %857 = vset.pattern.permute.xlu0 3
        %858 = vperm.xlu0 %857, %v434
        %v859 = vpop.permute.xlu0 %858
        %861 = vset.pattern.permute.xlu0 3
        %862 = vperm.xlu0 %861, %v435
        %v863 = vpop.permute.xlu0 %862
        %865 = vset.pattern.permute.xlu0 3
        %866 = vperm.xlu0 %865, %v436
        %v867 = vpop.permute.xlu0 %866
        %869 = vset.pattern.permute.xlu0 3
        %870 = vperm.xlu0 %869, %v437
        %v871 = vpop.permute.xlu0 %870
        %873 = vset.pattern.permute.xlu0 3
        %874 = vperm.xlu0 %873, %v438
        %v875 = vpop.permute.xlu0 %874
        %877 = vset.pattern.permute.xlu0 3
        %878 = vperm.xlu0 %877, %v439
        %v879 = vpop.permute.xlu0 %878
        %881 = vset.pattern.permute.xlu0 3
        %882 = vperm.xlu0 %881, %v440
        %v883 = vpop.permute.xlu0 %882
        %885 = vset.pattern.permute.xlu0 3
        %886 = vperm.xlu0 %885, %v441
        %v887 = vpop.permute.xlu0 %886
        %889 = vset.pattern.permute.xlu0 3
        %890 = vperm.xlu0 %889, %v442
        %v891 = vpop.permute.xlu0 %890
        %893 = vset.pattern.permute.xlu0 3
        %894 = vperm.xlu0 %893, %v443
        %v895 = vpop.permute.xlu0 %894
        %897 = vset.pattern.permute.xlu0 3
        %898 = vperm.xlu0 %897, %v444
        %v899 = vpop.permute.xlu0 %898
        %901 = vset.pattern.permute.xlu0 3
        %902 = vperm.xlu0 %901, %v445
        %v903 = vpop.permute.xlu0 %902
        %v905 = vmul.f32 %v815, %v835
        %v906 = vmul.f32 %v816, %v839
        %v907 = vmul.f32 %v817, %v843
        %v908 = vmul.f32 %v818, %v847
        %v909 = vmul.f32 %v819, %v851
        %v910 = vmul.f32 %v820, %v855
        %v911 = vmul.f32 %v821, %v859
        %v912 = vmul.f32 %v822, %v863
        %v913 = vmul.f32 %v823, %v867
        %v914 = vmul.f32 %v824, %v871
        %v915 = vmul.f32 %v825, %v875
        %v916 = vmul.f32 %v826, %v879
        %v917 = vmul.f32 %v827, %v883
        %v918 = vmul.f32 %v828, %v887
        %v919 = vmul.f32 %v829, %v891
        %v920 = vmul.f32 %v830, %v895
        %v921 = vmul.f32 %v831, %v899
        %v922 = vmul.f32 %v832, %v903
        %v923 = vpack.c.bf16 %v906, %v905
        %v924 = vpack.c.bf16 %v908, %v907
        %v925 = vpack.c.bf16 %v910, %v909
        %v926 = vpack.c.bf16 %v912, %v911
        %v927 = vpack.c.bf16 %v914, %v913
        %v928 = vpack.c.bf16 %v916, %v915
        %v929 = vpack.c.bf16 %v918, %v917
        %v930 = vpack.c.bf16 %v920, %v919
        %v931 = vpack.c.bf16 %v922, %v921
        %v932 = vld [vmem:[#allocation2 + $0x8] sm:$0xff]
        %v933 = vld [vmem:[#allocation2 + $0x10] sm:$0xff]
        %v934 = vld [vmem:[#allocation2 + $0x18] sm:$0xff]
        %v935 = vld [vmem:[#allocation2 + $0x20] sm:$0xff]
        %v936 = vld [vmem:[#allocation2 + $0x28] sm:$0xff]
        %v937 = vld [vmem:[#allocation2 + $0x30] sm:$0xff]
        %v938 = vld [vmem:[#allocation2 + $0x38] sm:$0xff]
        %v939 = vld [vmem:[#allocation2 + $0x40] sm:$0xff]
        %v940 = vld [vmem:[#allocation2 + $0x48] sm:$0xff]
        %v941 = vld [vmem:[#allocation2 + $0x50] sm:$0xff]
        %v942 = vld [vmem:[#allocation2 + $0x58] sm:$0xff]
        %v943 = vld [vmem:[#allocation2 + $0x60] sm:$0xff]
        %v944 = vld [vmem:[#allocation2 + $0x68] sm:$0xff]
        %v945 = vld [vmem:[#allocation2 + $0x70] sm:$0xff]
        %v946 = vld [vmem:[#allocation2 + $0x78] sm:$0xff]
        %v947 = vld [vmem:[#allocation2 + $0x80] sm:$0xff]
        %v948 = vld [vmem:[#allocation2 + $0x88] sm:$0xff]
        %v949 = vld [vmem:[#allocation2 + $0x90] sm:$0xff]
        %950 = vset.pattern.permute.xlu0 4
        %951 = vperm.xlu0 %950, %v428
        %v952 = vpop.permute.xlu0 %951
        %954 = vset.pattern.permute.xlu0 4
        %955 = vperm.xlu0 %954, %v429
        %v956 = vpop.permute.xlu0 %955
        %958 = vset.pattern.permute.xlu0 4
        %959 = vperm.xlu0 %958, %v430
        %v960 = vpop.permute.xlu0 %959
        %962 = vset.pattern.permute.xlu0 4
        %963 = vperm.xlu0 %962, %v431
        %v964 = vpop.permute.xlu0 %963
        %966 = vset.pattern.permute.xlu0 4
        %967 = vperm.xlu0 %966, %v432
        %v968 = vpop.permute.xlu0 %967
        %970 = vset.pattern.permute.xlu0 4
        %971 = vperm.xlu0 %970, %v433
        %v972 = vpop.permute.xlu0 %971
        %974 = vset.pattern.permute.xlu0 4
        %975 = vperm.xlu0 %974, %v434
        %v976 = vpop.permute.xlu0 %975
        %978 = vset.pattern.permute.xlu0 4
        %979 = vperm.xlu0 %978, %v435
        %v980 = vpop.permute.xlu0 %979
        %982 = vset.pattern.permute.xlu0 4
        %983 = vperm.xlu0 %982, %v436
        %v984 = vpop.permute.xlu0 %983
        %986 = vset.pattern.permute.xlu0 4
        %987 = vperm.xlu0 %986, %v437
        %v988 = vpop.permute.xlu0 %987
        %990 = vset.pattern.permute.xlu0 4
        %991 = vperm.xlu0 %990, %v438
        %v992 = vpop.permute.xlu0 %991
        %994 = vset.pattern.permute.xlu0 4
        %995 = vperm.xlu0 %994, %v439
        %v996 = vpop.permute.xlu0 %995
        %998 = vset.pattern.permute.xlu0 4
        %999 = vperm.xlu0 %998, %v440
        %v1000 = vpop.permute.xlu0 %999
        %1002 = vset.pattern.permute.xlu0 4
        %1003 = vperm.xlu0 %1002, %v441
        %v1004 = vpop.permute.xlu0 %1003
        %1006 = vset.pattern.permute.xlu0 4
        %1007 = vperm.xlu0 %1006, %v442
        %v1008 = vpop.permute.xlu0 %1007
        %1010 = vset.pattern.permute.xlu0 4
        %1011 = vperm.xlu0 %1010, %v443
        %v1012 = vpop.permute.xlu0 %1011
        %1014 = vset.pattern.permute.xlu0 4
        %1015 = vperm.xlu0 %1014, %v444
        %v1016 = vpop.permute.xlu0 %1015
        %1018 = vset.pattern.permute.xlu0 4
        %1019 = vperm.xlu0 %1018, %v445
        %v1020 = vpop.permute.xlu0 %1019
        %v1022 = vmul.f32 %v932, %v952
        %v1023 = vmul.f32 %v933, %v956
        %v1024 = vmul.f32 %v934, %v960
        %v1025 = vmul.f32 %v935, %v964
        %v1026 = vmul.f32 %v936, %v968
        %v1027 = vmul.f32 %v937, %v972
        %v1028 = vmul.f32 %v938, %v976
        %v1029 = vmul.f32 %v939, %v980
        %v1030 = vmul.f32 %v940, %v984
        %v1031 = vmul.f32 %v941, %v988
        %v1032 = vmul.f32 %v942, %v992
        %v1033 = vmul.f32 %v943, %v996
        %v1034 = vmul.f32 %v944, %v1000
        %v1035 = vmul.f32 %v945, %v1004
        %v1036 = vmul.f32 %v946, %v1008
        %v1037 = vmul.f32 %v947, %v1012
        %v1038 = vmul.f32 %v948, %v1016
        %v1039 = vmul.f32 %v949, %v1020
        %v1040 = vpack.c.bf16 %v1023, %v1022
        %v1041 = vpack.c.bf16 %v1025, %v1024
        %v1042 = vpack.c.bf16 %v1027, %v1026
        %v1043 = vpack.c.bf16 %v1029, %v1028
        %v1044 = vpack.c.bf16 %v1031, %v1030
        %v1045 = vpack.c.bf16 %v1033, %v1032
        %v1046 = vpack.c.bf16 %v1035, %v1034
        %v1047 = vpack.c.bf16 %v1037, %v1036
        %v1048 = vpack.c.bf16 %v1039, %v1038
        %v1049 = vld [vmem:[#allocation2 + $0x9] sm:$0xff]
        %v1050 = vld [vmem:[#allocation2 + $0x11] sm:$0xff]
        %v1051 = vld [vmem:[#allocation2 + $0x19] sm:$0xff]
        %v1052 = vld [vmem:[#allocation2 + $0x21] sm:$0xff]
        %v1053 = vld [vmem:[#allocation2 + $0x29] sm:$0xff]
        %v1054 = vld [vmem:[#allocation2 + $0x31] sm:$0xff]
        %v1055 = vld [vmem:[#allocation2 + $0x39] sm:$0xff]
        %v1056 = vld [vmem:[#allocation2 + $0x41] sm:$0xff]
        %v1057 = vld [vmem:[#allocation2 + $0x49] sm:$0xff]
        %v1058 = vld [vmem:[#allocation2 + $0x51] sm:$0xff]
        %v1059 = vld [vmem:[#allocation2 + $0x59] sm:$0xff]
        %v1060 = vld [vmem:[#allocation2 + $0x61] sm:$0xff]
        %v1061 = vld [vmem:[#allocation2 + $0x69] sm:$0xff]
        %v1062 = vld [vmem:[#allocation2 + $0x71] sm:$0xff]
        %v1063 = vld [vmem:[#allocation2 + $0x79] sm:$0xff]
        %v1064 = vld [vmem:[#allocation2 + $0x81] sm:$0xff]
        %v1065 = vld [vmem:[#allocation2 + $0x89] sm:$0xff]
        %v1066 = vld [vmem:[#allocation2 + $0x91] sm:$0xff]
        %1067 = vset.pattern.permute.xlu0 5
        %1068 = vperm.xlu0 %1067, %v428
        %v1069 = vpop.permute.xlu0 %1068
        %1071 = vset.pattern.permute.xlu0 5
        %1072 = vperm.xlu0 %1071, %v429
        %v1073 = vpop.permute.xlu0 %1072
        %1075 = vset.pattern.permute.xlu0 5
        %1076 = vperm.xlu0 %1075, %v430
        %v1077 = vpop.permute.xlu0 %1076
        %1079 = vset.pattern.permute.xlu0 5
        %1080 = vperm.xlu0 %1079, %v431
        %v1081 = vpop.permute.xlu0 %1080
        %1083 = vset.pattern.permute.xlu0 5
        %1084 = vperm.xlu0 %1083, %v432
        %v1085 = vpop.permute.xlu0 %1084
        %1087 = vset.pattern.permute.xlu0 5
        %1088 = vperm.xlu0 %1087, %v433
        %v1089 = vpop.permute.xlu0 %1088
        %1091 = vset.pattern.permute.xlu0 5
        %1092 = vperm.xlu0 %1091, %v434
        %v1093 = vpop.permute.xlu0 %1092
        %1095 = vset.pattern.permute.xlu0 5
        %1096 = vperm.xlu0 %1095, %v435
        %v1097 = vpop.permute.xlu0 %1096
        %1099 = vset.pattern.permute.xlu0 5
        %1100 = vperm.xlu0 %1099, %v436
        %v1101 = vpop.permute.xlu0 %1100
        %1103 = vset.pattern.permute.xlu0 5
        %1104 = vperm.xlu0 %1103, %v437
        %v1105 = vpop.permute.xlu0 %1104
        %1107 = vset.pattern.permute.xlu0 5
        %1108 = vperm.xlu0 %1107, %v438
        %v1109 = vpop.permute.xlu0 %1108
        %1111 = vset.pattern.permute.xlu0 5
        %1112 = vperm.xlu0 %1111, %v439
        %v1113 = vpop.permute.xlu0 %1112
        %1115 = vset.pattern.permute.xlu0 5
        %1116 = vperm.xlu0 %1115, %v440
        %v1117 = vpop.permute.xlu0 %1116
        %1119 = vset.pattern.permute.xlu0 5
        %1120 = vperm.xlu0 %1119, %v441
        %v1121 = vpop.permute.xlu0 %1120
        %1123 = vset.pattern.permute.xlu0 5
        %1124 = vperm.xlu0 %1123, %v442
        %v1125 = vpop.permute.xlu0 %1124
        %1127 = vset.pattern.permute.xlu0 5
        %1128 = vperm.xlu0 %1127, %v443
        %v1129 = vpop.permute.xlu0 %1128
        %1131 = vset.pattern.permute.xlu0 5
        %1132 = vperm.xlu0 %1131, %v444
        %v1133 = vpop.permute.xlu0 %1132
        %1135 = vset.pattern.permute.xlu0 5
        %1136 = vperm.xlu0 %1135, %v445
        %v1137 = vpop.permute.xlu0 %1136
        %v1139 = vmul.f32 %v1049, %v1069
        %v1140 = vmul.f32 %v1050, %v1073
        %v1141 = vmul.f32 %v1051, %v1077
        %v1142 = vmul.f32 %v1052, %v1081
        %v1143 = vmul.f32 %v1053, %v1085
        %v1144 = vmul.f32 %v1054, %v1089
        %v1145 = vmul.f32 %v1055, %v1093
        %v1146 = vmul.f32 %v1056, %v1097
        %v1147 = vmul.f32 %v1057, %v1101
        %v1148 = vmul.f32 %v1058, %v1105
        %v1149 = vmul.f32 %v1059, %v1109
        %v1150 = vmul.f32 %v1060, %v1113
        %v1151 = vmul.f32 %v1061, %v1117
        %v1152 = vmul.f32 %v1062, %v1121
        %v1153 = vmul.f32 %v1063, %v1125
        %v1154 = vmul.f32 %v1064, %v1129
        %v1155 = vmul.f32 %v1065, %v1133
        %v1156 = vmul.f32 %v1066, %v1137
        %v1157 = vpack.c.bf16 %v1140, %v1139
        %v1158 = vpack.c.bf16 %v1142, %v1141
        %v1159 = vpack.c.bf16 %v1144, %v1143
        %v1160 = vpack.c.bf16 %v1146, %v1145
        %v1161 = vpack.c.bf16 %v1148, %v1147
        %v1162 = vpack.c.bf16 %v1150, %v1149
        %v1163 = vpack.c.bf16 %v1152, %v1151
        %v1164 = vpack.c.bf16 %v1154, %v1153
        %v1165 = vpack.c.bf16 %v1156, %v1155
        %v1166 = vld [vmem:[#allocation2 + $0xa] sm:$0xff]
        %v1167 = vld [vmem:[#allocation2 + $0x12] sm:$0xff]
        %v1168 = vld [vmem:[#allocation2 + $0x1a] sm:$0xff]
        %v1169 = vld [vmem:[#allocation2 + $0x22] sm:$0xff]
        %v1170 = vld [vmem:[#allocation2 + $0x2a] sm:$0xff]
        %v1171 = vld [vmem:[#allocation2 + $0x32] sm:$0xff]
        %v1172 = vld [vmem:[#allocation2 + $0x3a] sm:$0xff]
        %v1173 = vld [vmem:[#allocation2 + $0x42] sm:$0xff]
        %v1174 = vld [vmem:[#allocation2 + $0x4a] sm:$0xff]
        %v1175 = vld [vmem:[#allocation2 + $0x52] sm:$0xff]
        %v1176 = vld [vmem:[#allocation2 + $0x5a] sm:$0xff]
        %v1177 = vld [vmem:[#allocation2 + $0x62] sm:$0xff]
        %v1178 = vld [vmem:[#allocation2 + $0x6a] sm:$0xff]
        %v1179 = vld [vmem:[#allocation2 + $0x72] sm:$0xff]
        %v1180 = vld [vmem:[#allocation2 + $0x7a] sm:$0xff]
        %v1181 = vld [vmem:[#allocation2 + $0x82] sm:$0xff]
        %v1182 = vld [vmem:[#allocation2 + $0x8a] sm:$0xff]
        %v1183 = vld [vmem:[#allocation2 + $0x92] sm:$0xff]
        %1184 = vset.pattern.permute.xlu0 6
        %1185 = vperm.xlu0 %1184, %v428
        %v1186 = vpop.permute.xlu0 %1185
        %1188 = vset.pattern.permute.xlu0 6
        %1189 = vperm.xlu0 %1188, %v429
        %v1190 = vpop.permute.xlu0 %1189
        %1192 = vset.pattern.permute.xlu0 6
        %1193 = vperm.xlu0 %1192, %v430
        %v1194 = vpop.permute.xlu0 %1193
        %1196 = vset.pattern.permute.xlu0 6
        %1197 = vperm.xlu0 %1196, %v431
        %v1198 = vpop.permute.xlu0 %1197
        %1200 = vset.pattern.permute.xlu0 6
        %1201 = vperm.xlu0 %1200, %v432
        %v1202 = vpop.permute.xlu0 %1201
        %1204 = vset.pattern.permute.xlu0 6
        %1205 = vperm.xlu0 %1204, %v433
        %v1206 = vpop.permute.xlu0 %1205
        %1208 = vset.pattern.permute.xlu0 6
        %1209 = vperm.xlu0 %1208, %v434
        %v1210 = vpop.permute.xlu0 %1209
        %1212 = vset.pattern.permute.xlu0 6
        %1213 = vperm.xlu0 %1212, %v435
        %v1214 = vpop.permute.xlu0 %1213
        %1216 = vset.pattern.permute.xlu0 6
        %1217 = vperm.xlu0 %1216, %v436
        %v1218 = vpop.permute.xlu0 %1217
        %1220 = vset.pattern.permute.xlu0 6
        %1221 = vperm.xlu0 %1220, %v437
        %v1222 = vpop.permute.xlu0 %1221
        %1224 = vset.pattern.permute.xlu0 6
        %1225 = vperm.xlu0 %1224, %v438
        %v1226 = vpop.permute.xlu0 %1225
        %1228 = vset.pattern.permute.xlu0 6
        %1229 = vperm.xlu0 %1228, %v439
        %v1230 = vpop.permute.xlu0 %1229
        %1232 = vset.pattern.permute.xlu0 6
        %1233 = vperm.xlu0 %1232, %v440
        %v1234 = vpop.permute.xlu0 %1233
        %1236 = vset.pattern.permute.xlu0 6
        %1237 = vperm.xlu0 %1236, %v441
        %v1238 = vpop.permute.xlu0 %1237
        %1240 = vset.pattern.permute.xlu0 6
        %1241 = vperm.xlu0 %1240, %v442
        %v1242 = vpop.permute.xlu0 %1241
        %1244 = vset.pattern.permute.xlu0 6
        %1245 = vperm.xlu0 %1244, %v443
        %v1246 = vpop.permute.xlu0 %1245
        %1248 = vset.pattern.permute.xlu0 6
        %1249 = vperm.xlu0 %1248, %v444
        %v1250 = vpop.permute.xlu0 %1249
        %1252 = vset.pattern.permute.xlu0 6
        %1253 = vperm.xlu0 %1252, %v445
        %v1254 = vpop.permute.xlu0 %1253
        %v1256 = vmul.f32 %v1166, %v1186
        %v1257 = vmul.f32 %v1167, %v1190
        %v1258 = vmul.f32 %v1168, %v1194
        %v1259 = vmul.f32 %v1169, %v1198
        %v1260 = vmul.f32 %v1170, %v1202
        %v1261 = vmul.f32 %v1171, %v1206
        %v1262 = vmul.f32 %v1172, %v1210
        %v1263 = vmul.f32 %v1173, %v1214
        %v1264 = vmul.f32 %v1174, %v1218
        %v1265 = vmul.f32 %v1175, %v1222
        %v1266 = vmul.f32 %v1176, %v1226
        %v1267 = vmul.f32 %v1177, %v1230
        %v1268 = vmul.f32 %v1178, %v1234
        %v1269 = vmul.f32 %v1179, %v1238
        %v1270 = vmul.f32 %v1180, %v1242
        %v1271 = vmul.f32 %v1181, %v1246
        %v1272 = vmul.f32 %v1182, %v1250
        %v1273 = vmul.f32 %v1183, %v1254
        %v1274 = vpack.c.bf16 %v1257, %v1256
        %v1275 = vpack.c.bf16 %v1259, %v1258
        %v1276 = vpack.c.bf16 %v1261, %v1260
        %v1277 = vpack.c.bf16 %v1263, %v1262
        %v1278 = vpack.c.bf16 %v1265, %v1264
        %v1279 = vpack.c.bf16 %v1267, %v1266
        %v1280 = vpack.c.bf16 %v1269, %v1268
        %v1281 = vpack.c.bf16 %v1271, %v1270
        %v1282 = vpack.c.bf16 %v1273, %v1272
        %v1283 = vld [vmem:[#allocation2 + $0xb] sm:$0xff]
        %v1284 = vld [vmem:[#allocation2 + $0x13] sm:$0xff]
        %v1285 = vld [vmem:[#allocation2 + $0x1b] sm:$0xff]
        %v1286 = vld [vmem:[#allocation2 + $0x23] sm:$0xff]
        %v1287 = vld [vmem:[#allocation2 + $0x2b] sm:$0xff]
        %v1288 = vld [vmem:[#allocation2 + $0x33] sm:$0xff]
        %v1289 = vld [vmem:[#allocation2 + $0x3b] sm:$0xff]
        %v1290 = vld [vmem:[#allocation2 + $0x43] sm:$0xff]
        %v1291 = vld [vmem:[#allocation2 + $0x4b] sm:$0xff]
        %v1292 = vld [vmem:[#allocation2 + $0x53] sm:$0xff]
        %v1293 = vld [vmem:[#allocation2 + $0x5b] sm:$0xff]
        %v1294 = vld [vmem:[#allocation2 + $0x63] sm:$0xff]
        %v1295 = vld [vmem:[#allocation2 + $0x6b] sm:$0xff]
        %v1296 = vld [vmem:[#allocation2 + $0x73] sm:$0xff]
        %v1297 = vld [vmem:[#allocation2 + $0x7b] sm:$0xff]
        %v1298 = vld [vmem:[#allocation2 + $0x83] sm:$0xff]
        %v1299 = vld [vmem:[#allocation2 + $0x8b] sm:$0xff]
        %v1300 = vld [vmem:[#allocation2 + $0x93] sm:$0xff]
        %1301 = vset.pattern.permute.xlu0 7
        %1302 = vperm.xlu0 %1301, %v428
        %v1303 = vpop.permute.xlu0 %1302
        %1305 = vset.pattern.permute.xlu0 7
        %1306 = vperm.xlu0 %1305, %v429
        %v1307 = vpop.permute.xlu0 %1306
        %1309 = vset.pattern.permute.xlu0 7
        %1310 = vperm.xlu0 %1309, %v430
        %v1311 = vpop.permute.xlu0 %1310
        %1313 = vset.pattern.permute.xlu0 7
        %1314 = vperm.xlu0 %1313, %v431
        %v1315 = vpop.permute.xlu0 %1314
        %1317 = vset.pattern.permute.xlu0 7
        %1318 = vperm.xlu0 %1317, %v432
        %v1319 = vpop.permute.xlu0 %1318
        %1321 = vset.pattern.permute.xlu0 7
        %1322 = vperm.xlu0 %1321, %v433
        %v1323 = vpop.permute.xlu0 %1322
        %1325 = vset.pattern.permute.xlu0 7
        %1326 = vperm.xlu0 %1325, %v434
        %v1327 = vpop.permute.xlu0 %1326
        %1329 = vset.pattern.permute.xlu0 7
        %1330 = vperm.xlu0 %1329, %v435
        %v1331 = vpop.permute.xlu0 %1330
        %1333 = vset.pattern.permute.xlu0 7
        %1334 = vperm.xlu0 %1333, %v436
        %v1335 = vpop.permute.xlu0 %1334
        %1337 = vset.pattern.permute.xlu0 7
        %1338 = vperm.xlu0 %1337, %v437
        %v1339 = vpop.permute.xlu0 %1338
        %1341 = vset.pattern.permute.xlu0 7
        %1342 = vperm.xlu0 %1341, %v438
        %v1343 = vpop.permute.xlu0 %1342
        %1345 = vset.pattern.permute.xlu0 7
        %1346 = vperm.xlu0 %1345, %v439
        %v1347 = vpop.permute.xlu0 %1346
        %1349 = vset.pattern.permute.xlu0 7
        %1350 = vperm.xlu0 %1349, %v440
        %v1351 = vpop.permute.xlu0 %1350
        %1353 = vset.pattern.permute.xlu0 7
        %1354 = vperm.xlu0 %1353, %v441
        %v1355 = vpop.permute.xlu0 %1354
        %1357 = vset.pattern.permute.xlu0 7
        %1358 = vperm.xlu0 %1357, %v442
        %v1359 = vpop.permute.xlu0 %1358
        %1361 = vset.pattern.permute.xlu0 7
        %1362 = vperm.xlu0 %1361, %v443
        %v1363 = vpop.permute.xlu0 %1362
        %1365 = vset.pattern.permute.xlu0 7
        %1366 = vperm.xlu0 %1365, %v444
        %v1367 = vpop.permute.xlu0 %1366
        %1369 = vset.pattern.permute.xlu0 7
        %1370 = vperm.xlu0 %1369, %v445
        %v1371 = vpop.permute.xlu0 %1370
        %v1373 = vmul.f32 %v1283, %v1303
        %v1374 = vmul.f32 %v1284, %v1307
        %v1375 = vmul.f32 %v1285, %v1311
        %v1376 = vmul.f32 %v1286, %v1315
        %v1377 = vmul.f32 %v1287, %v1319
        %v1378 = vmul.f32 %v1288, %v1323
        %v1379 = vmul.f32 %v1289, %v1327
        %v1380 = vmul.f32 %v1290, %v1331
        %v1381 = vmul.f32 %v1291, %v1335
        %v1382 = vmul.f32 %v1292, %v1339
        %v1383 = vmul.f32 %v1293, %v1343
        %v1384 = vmul.f32 %v1294, %v1347
        %v1385 = vmul.f32 %v1295, %v1351
        %v1386 = vmul.f32 %v1296, %v1355
        %v1387 = vmul.f32 %v1297, %v1359
        %v1388 = vmul.f32 %v1298, %v1363
        %v1389 = vmul.f32 %v1299, %v1367
        %v1390 = vmul.f32 %v1300, %v1371
        %v1391 = vpack.c.bf16 %v1374, %v1373
        %v1392 = vpack.c.bf16 %v1376, %v1375
        %v1393 = vpack.c.bf16 %v1378, %v1377
        %v1394 = vpack.c.bf16 %v1380, %v1379
        %v1395 = vpack.c.bf16 %v1382, %v1381
        %v1396 = vpack.c.bf16 %v1384, %v1383
        %v1397 = vpack.c.bf16 %v1386, %v1385
        %v1398 = vpack.c.bf16 %v1388, %v1387
        %v1399 = vpack.c.bf16 %v1390, %v1389
        %v1400 = vld [vmem:[#allocation2 + $0xc] sm:$0xff]
        %v1401 = vld [vmem:[#allocation2 + $0x14] sm:$0xff]
        %v1402 = vld [vmem:[#allocation2 + $0x1c] sm:$0xff]
        %v1403 = vld [vmem:[#allocation2 + $0x24] sm:$0xff]
        %v1404 = vld [vmem:[#allocation2 + $0x2c] sm:$0xff]
        %v1405 = vld [vmem:[#allocation2 + $0x34] sm:$0xff]
        %v1406 = vld [vmem:[#allocation2 + $0x3c] sm:$0xff]
        %v1407 = vld [vmem:[#allocation2 + $0x44] sm:$0xff]
        %v1408 = vld [vmem:[#allocation2 + $0x4c] sm:$0xff]
        %v1409 = vld [vmem:[#allocation2 + $0x54] sm:$0xff]
        %v1410 = vld [vmem:[#allocation2 + $0x5c] sm:$0xff]
        %v1411 = vld [vmem:[#allocation2 + $0x64] sm:$0xff]
        %v1412 = vld [vmem:[#allocation2 + $0x6c] sm:$0xff]
        %v1413 = vld [vmem:[#allocation2 + $0x74] sm:$0xff]
        %v1414 = vld [vmem:[#allocation2 + $0x7c] sm:$0xff]
        %v1415 = vld [vmem:[#allocation2 + $0x84] sm:$0xff]
        %v1416 = vld [vmem:[#allocation2 + $0x8c] sm:$0xff]
        %v1417 = vld [vmem:[#allocation2 + $0x94] sm:$0xff]
        %1418 = vset.pattern.permute.xlu0 8
        %1419 = vperm.xlu0 %1418, %v428
        %v1420 = vpop.permute.xlu0 %1419
        %1422 = vset.pattern.permute.xlu0 8
        %1423 = vperm.xlu0 %1422, %v429
        %v1424 = vpop.permute.xlu0 %1423
        %1426 = vset.pattern.permute.xlu0 8
        %1427 = vperm.xlu0 %1426, %v430
        %v1428 = vpop.permute.xlu0 %1427
        %1430 = vset.pattern.permute.xlu0 8
        %1431 = vperm.xlu0 %1430, %v431
        %v1432 = vpop.permute.xlu0 %1431
        %1434 = vset.pattern.permute.xlu0 8
        %1435 = vperm.xlu0 %1434, %v432
        %v1436 = vpop.permute.xlu0 %1435
        %1438 = vset.pattern.permute.xlu0 8
        %1439 = vperm.xlu0 %1438, %v433
        %v1440 = vpop.permute.xlu0 %1439
        %1442 = vset.pattern.permute.xlu0 8
        %1443 = vperm.xlu0 %1442, %v434
        %v1444 = vpop.permute.xlu0 %1443
        %1446 = vset.pattern.permute.xlu0 8
        %1447 = vperm.xlu0 %1446, %v435
        %v1448 = vpop.permute.xlu0 %1447
        %1450 = vset.pattern.permute.xlu0 8
        %1451 = vperm.xlu0 %1450, %v436
        %v1452 = vpop.permute.xlu0 %1451
        %1454 = vset.pattern.permute.xlu0 8
        %1455 = vperm.xlu0 %1454, %v437
        %v1456 = vpop.permute.xlu0 %1455
        %1458 = vset.pattern.permute.xlu0 8
        %1459 = vperm.xlu0 %1458, %v438
        %v1460 = vpop.permute.xlu0 %1459
        %1462 = vset.pattern.permute.xlu0 8
        %1463 = vperm.xlu0 %1462, %v439
        %v1464 = vpop.permute.xlu0 %1463
        %1466 = vset.pattern.permute.xlu0 8
        %1467 = vperm.xlu0 %1466, %v440
        %v1468 = vpop.permute.xlu0 %1467
        %1470 = vset.pattern.permute.xlu0 8
        %1471 = vperm.xlu0 %1470, %v441
        %v1472 = vpop.permute.xlu0 %1471
        %1474 = vset.pattern.permute.xlu0 8
        %1475 = vperm.xlu0 %1474, %v442
        %v1476 = vpop.permute.xlu0 %1475
        %1478 = vset.pattern.permute.xlu0 8
        %1479 = vperm.xlu0 %1478, %v443
        %v1480 = vpop.permute.xlu0 %1479
        %1482 = vset.pattern.permute.xlu0 8
        %1483 = vperm.xlu0 %1482, %v444
        %v1484 = vpop.permute.xlu0 %1483
        %1486 = vset.pattern.permute.xlu0 8
        %1487 = vperm.xlu0 %1486, %v445
        %v1488 = vpop.permute.xlu0 %1487
        %v1490 = vmul.f32 %v1400, %v1420
        %v1491 = vmul.f32 %v1401, %v1424
        %v1492 = vmul.f32 %v1402, %v1428
        %v1493 = vmul.f32 %v1403, %v1432
        %v1494 = vmul.f32 %v1404, %v1436
        %v1495 = vmul.f32 %v1405, %v1440
        %v1496 = vmul.f32 %v1406, %v1444
        %v1497 = vmul.f32 %v1407, %v1448
        %v1498 = vmul.f32 %v1408, %v1452
        %v1499 = vmul.f32 %v1409, %v1456
        %v1500 = vmul.f32 %v1410, %v1460
        %v1501 = vmul.f32 %v1411, %v1464
        %v1502 = vmul.f32 %v1412, %v1468
        %v1503 = vmul.f32 %v1413, %v1472
        %v1504 = vmul.f32 %v1414, %v1476
        %v1505 = vmul.f32 %v1415, %v1480
        %v1506 = vmul.f32 %v1416, %v1484
        %v1507 = vmul.f32 %v1417, %v1488
        %v1508 = vpack.c.bf16 %v1491, %v1490
        %v1509 = vpack.c.bf16 %v1493, %v1492
        %v1510 = vpack.c.bf16 %v1495, %v1494
        %v1511 = vpack.c.bf16 %v1497, %v1496
        %v1512 = vpack.c.bf16 %v1499, %v1498
        %v1513 = vpack.c.bf16 %v1501, %v1500
        %v1514 = vpack.c.bf16 %v1503, %v1502
        %v1515 = vpack.c.bf16 %v1505, %v1504
        %v1516 = vpack.c.bf16 %v1507, %v1506
        %v1517 = vld [vmem:[%s249] sm:$0xf]
        %v1518 = vld [vmem:[%s249 + $0x4] sm:$0xf]
        %v1519 = vld [vmem:[%s249 + $0x8] sm:$0xf]
        %v1520 = vld [vmem:[%s249 + $0xc] sm:$0xf]
        %v1521 = vld [vmem:[%s249 + $0x10] sm:$0xf]
        %v1522 = vld [vmem:[%s249 + $0x14] sm:$0xf]
        %v1523 = vld [vmem:[%s249 + $0x18] sm:$0xf]
        %v1524 = vld [vmem:[%s249 + $0x1c] sm:$0xf]
        %v1525 = vld [vmem:[%s249 + $0x20] sm:$0xf]
        %v1526 = vld [vmem:[%s249 + $0x24] sm:$0xf]
        %v1527 = vld [vmem:[%s249 + $0x28] sm:$0xf]
        %v1528 = vld [vmem:[%s249 + $0x2c] sm:$0xf]
        %v1529 = vld [vmem:[%s249 + $0x30] sm:$0xf]
        %v1530 = vld [vmem:[%s249 + $0x34] sm:$0xf]
        %v1531 = vld [vmem:[%s249 + $0x38] sm:$0xf]
        %v1532 = vld [vmem:[%s249 + $0x3c] sm:$0xf]
        %v1533 = vld [vmem:[%s249 + $0x40] sm:$0xf]
        %v1534 = vld [vmem:[%s249 + $0x44] sm:$0xf]
        %v1535 = vld [vmem:[%s249 + $0x48] sm:$0xf]
        %v1536 = vld [vmem:[%s249 + $0x4c] sm:$0xf]
        %v1537 = vld [vmem:[%s249 + $0x50] sm:$0xf]
        %v1538 = vld [vmem:[%s249 + $0x54] sm:$0xf]
        %v1539 = vld [vmem:[%s249 + $0x58] sm:$0xf]
        %v1540 = vld [vmem:[%s249 + $0x5c] sm:$0xf]
        %v1541 = vld [vmem:[%s249 + $0x60] sm:$0xf]
        %v1542 = vld [vmem:[%s249 + $0x64] sm:$0xf]
        %v1543 = vld [vmem:[%s249 + $0x68] sm:$0xf]
        %v1544 = vld [vmem:[%s249 + $0x6c] sm:$0xf]
        %v1545 = vld [vmem:[%s249 + $0x70] sm:$0xf]
        %v1546 = vld [vmem:[%s249 + $0x74] sm:$0xf]
        %v1547 = vld [vmem:[%s249 + $0x78] sm:$0xf]
        %v1548 = vld [vmem:[%s249 + $0x7c] sm:$0xf]
        %v1549 = vld [vmem:[%s249 + $0x80] sm:$0xf]
        %v1550 = vld [vmem:[%s249 + $0x84] sm:$0xf]
        %v1551 = vld [vmem:[%s249 + $0x88] sm:$0xf]
        %v1552 = vld [vmem:[%s249 + $0x8c] sm:$0xf]
        %v1553 = vld [vmem:[%s249 + $0x90] sm:$0xf]
        %v1554 = vld [vmem:[%s249 + $0x94] sm:$0xf]
        %v1555 = vld [vmem:[%s249 + $0x98] sm:$0xf]
        %v1556 = vld [vmem:[%s249 + $0x9c] sm:$0xf]
        %v1557 = vld [vmem:[%s249 + $0xa0] sm:$0xf]
        %v1558 = vld [vmem:[%s249 + $0xa4] sm:$0xf]
        %v1559 = vld [vmem:[%s249 + $0xa8] sm:$0xf]
        %v1560 = vld [vmem:[%s249 + $0xac] sm:$0xf]
        %v1561 = vld [vmem:[%s249 + $0xb0] sm:$0xf]
        %v1562 = vld [vmem:[%s249 + $0xb4] sm:$0xf]
        %v1563 = vld [vmem:[%s249 + $0xb8] sm:$0xf]
        %v1564 = vld [vmem:[%s249 + $0xbc] sm:$0xf]
        %v1565 = vld [vmem:[%s249 + $0xc0] sm:$0xf]
        %v1566 = vld [vmem:[%s249 + $0xc4] sm:$0xf]
        %v1567 = vld [vmem:[%s249 + $0xc8] sm:$0xf]
        %v1568 = vld [vmem:[%s249 + $0xcc] sm:$0xf]
        %v1569 = vld [vmem:[%s249 + $0xd0] sm:$0xf]
        %v1570 = vld [vmem:[%s249 + $0xd4] sm:$0xf]
        %v1571 = vld [vmem:[%s249 + $0xd8] sm:$0xf]
        %v1572 = vld [vmem:[%s249 + $0xdc] sm:$0xf]
        %v1573 = vld [vmem:[%s249 + $0xe0] sm:$0xf]
        %v1574 = vld [vmem:[%s249 + $0xe4] sm:$0xf]
        %v1575 = vld [vmem:[%s249 + $0xe8] sm:$0xf]
        %v1576 = vld [vmem:[%s249 + $0xec] sm:$0xf]
        %v1577 = vld [vmem:[%s249 + $0xf0] sm:$0xf]
        %v1578 = vld [vmem:[%s249 + $0xf4] sm:$0xf]
        %v1579 = vld [vmem:[%s249 + $0xf8] sm:$0xf]
        %v1580 = vld [vmem:[%s249 + $0xfc] sm:$0xf]
        %v1581 = vld [vmem:[%s249 + $0x100] sm:$0xf]
        %v1582 = vld [vmem:[%s249 + $0x104] sm:$0xf]
        %v1583 = vld [vmem:[%s249 + $0x108] sm:$0xf]
        %v1584 = vld [vmem:[%s249 + $0x10c] sm:$0xf]
        %v1585 = vld [vmem:[%s249 + $0x110] sm:$0xf]
        %v1586 = vld [vmem:[%s249 + $0x114] sm:$0xf]
        %v1587 = vld [vmem:[%s249 + $0x118] sm:$0xf]
        %v1588 = vld [vmem:[%s249 + $0x11c] sm:$0xf]
        %v1589 = vld [vmem:[%s249 + $0x120] sm:$0xf]
        %v1590 = vld [vmem:[%s249 + $0x124] sm:$0xf]
        %v1591 = vld [vmem:[%s249 + $0x128] sm:$0xf]
        %v1592 = vld [vmem:[%s249 + $0x12c] sm:$0xf]
        %v1593 = vld [vmem:[%s249 + $0x130] sm:$0xf]
        %v1594 = vld [vmem:[%s249 + $0x134] sm:$0xf]
        %v1595 = vld [vmem:[%s249 + $0x138] sm:$0xf]
        %v1596 = vld [vmem:[%s249 + $0x13c] sm:$0xf]
        %v1597 = vld [vmem:[%s249 + $0x140] sm:$0xf]
        %v1598 = vld [vmem:[%s249 + $0x144] sm:$0xf]
        %v1599 = vld [vmem:[%s249 + $0x148] sm:$0xf]
        %v1600 = vld [vmem:[%s249 + $0x14c] sm:$0xf]
        %v1601 = vld [vmem:[%s249 + $0x150] sm:$0xf]
        %v1602 = vld [vmem:[%s249 + $0x154] sm:$0xf]
        %v1603 = vld [vmem:[%s249 + $0x158] sm:$0xf]
        %v1604 = vld [vmem:[%s249 + $0x15c] sm:$0xf]
        %v1605 = vld [vmem:[%s249 + $0x160] sm:$0xf]
        %v1606 = vld [vmem:[%s249 + $0x164] sm:$0xf]
        %v1607 = vld [vmem:[%s249 + $0x168] sm:$0xf]
        %v1608 = vld [vmem:[%s249 + $0x16c] sm:$0xf]
        %v1609 = vld [vmem:[%s249 + $0x170] sm:$0xf]
        %v1610 = vld [vmem:[%s249 + $0x174] sm:$0xf]
        %v1611 = vld [vmem:[%s249 + $0x178] sm:$0xf]
        %v1612 = vld [vmem:[%s249 + $0x17c] sm:$0xf]
        %v1613 = vld [vmem:[%s249 + $0x180] sm:$0xf]
        %v1614 = vld [vmem:[%s249 + $0x184] sm:$0xf]
        %v1615 = vld [vmem:[%s249 + $0x188] sm:$0xf]
        %v1616 = vld [vmem:[%s249 + $0x18c] sm:$0xf]
        %v1617 = vld [vmem:[%s249 + $0x190] sm:$0xf]
        %v1618 = vld [vmem:[%s249 + $0x194] sm:$0xf]
        %v1619 = vld [vmem:[%s249 + $0x198] sm:$0xf]
        %v1620 = vld [vmem:[%s249 + $0x19c] sm:$0xf]
        %v1621 = vld [vmem:[%s249 + $0x1a0] sm:$0xf]
        %v1622 = vld [vmem:[%s249 + $0x1a4] sm:$0xf]
        %v1623 = vld [vmem:[%s249 + $0x1a8] sm:$0xf]
        %v1624 = vld [vmem:[%s249 + $0x1ac] sm:$0xf]
        %v1625 = vld [vmem:[%s249 + $0x1b0] sm:$0xf]
        %v1626 = vld [vmem:[%s249 + $0x1b4] sm:$0xf]
        %v1627 = vld [vmem:[%s249 + $0x1b8] sm:$0xf]
        %v1628 = vld [vmem:[%s249 + $0x1bc] sm:$0xf]
        %v1629 = vld [vmem:[%s249 + $0x1c0] sm:$0xf]
        %v1630 = vld [vmem:[%s249 + $0x1c4] sm:$0xf]
        %v1631 = vld [vmem:[%s249 + $0x1c8] sm:$0xf]
        %v1632 = vld [vmem:[%s249 + $0x1cc] sm:$0xf]
        %v1633 = vld [vmem:[%s249 + $0x1d0] sm:$0xf]
        %v1634 = vld [vmem:[%s249 + $0x1d4] sm:$0xf]
        %v1635 = vld [vmem:[%s249 + $0x1d8] sm:$0xf]
        %v1636 = vld [vmem:[%s249 + $0x1dc] sm:$0xf]
        %v1637 = vld [vmem:[%s249 + $0x1e0] sm:$0xf]
        %v1638 = vld [vmem:[%s249 + $0x1e4] sm:$0xf]
        %v1639 = vld [vmem:[%s249 + $0x1e8] sm:$0xf]
        %v1640 = vld [vmem:[%s249 + $0x1ec] sm:$0xf]
        %v1641 = vld [vmem:[%s249 + $0x1f0] sm:$0xf]
        %v1642 = vld [vmem:[%s249 + $0x1f4] sm:$0xf]
        %v1643 = vld [vmem:[%s249 + $0x1f8] sm:$0xf]
        %v1644 = vld [vmem:[%s249 + $0x1fc] sm:$0xf]
        %v1645 = vld [vmem:[%s249 + $0x200] sm:$0xf]
        %v1646 = vld [vmem:[%s249 + $0x204] sm:$0xf]
        %v1647 = vld [vmem:[%s249 + $0x208] sm:$0xf]
        %v1648 = vld [vmem:[%s249 + $0x20c] sm:$0xf]
        %v1649 = vld [vmem:[%s249 + $0x210] sm:$0xf]
        %v1650 = vld [vmem:[%s249 + $0x214] sm:$0xf]
        %v1651 = vld [vmem:[%s249 + $0x218] sm:$0xf]
        %v1652 = vld [vmem:[%s249 + $0x21c] sm:$0xf]
        %v1653 = vld [vmem:[%s249 + $0x220] sm:$0xf]
        %v1654 = vld [vmem:[%s249 + $0x224] sm:$0xf]
        %v1655 = vld [vmem:[%s249 + $0x228] sm:$0xf]
        %v1656 = vld [vmem:[%s249 + $0x22c] sm:$0xf]
        %v1657 = vld [vmem:[%s249 + $0x230] sm:$0xf]
        %v1658 = vld [vmem:[%s249 + $0x234] sm:$0xf]
        %v1659 = vld [vmem:[%s249 + $0x238] sm:$0xf]
        %v1660 = vld [vmem:[%s249 + $0x23c] sm:$0xf]
        %v1805 = vunpack.c.l.b16 %v1517
        %v1806 = vunpack.c.l.b16 %v1518
        %v1807 = vunpack.c.l.b16 %v1519
        %v1808 = vunpack.c.l.b16 %v1520
        %v1809 = vunpack.c.l.b16 %v1521
        %v1810 = vunpack.c.l.b16 %v1522
        %v1811 = vunpack.c.l.b16 %v1523
        %v1812 = vunpack.c.l.b16 %v1524
        %v1813 = vunpack.c.l.b16 %v1525
        %v1814 = vunpack.c.l.b16 %v1526
        %v1815 = vunpack.c.l.b16 %v1527
        %v1816 = vunpack.c.l.b16 %v1528
        %v1817 = vunpack.c.l.b16 %v1529
        %v1818 = vunpack.c.l.b16 %v1530
        %v1819 = vunpack.c.l.b16 %v1531
        %v1820 = vunpack.c.l.b16 %v1532
        %v1821 = vunpack.c.l.b16 %v1533
        %v1822 = vunpack.c.l.b16 %v1534
        %v1823 = vunpack.c.l.b16 %v1535
        %v1824 = vunpack.c.l.b16 %v1536
        %v1825 = vunpack.c.l.b16 %v1537
        %v1826 = vunpack.c.l.b16 %v1538
        %v1827 = vunpack.c.l.b16 %v1539
        %v1828 = vunpack.c.l.b16 %v1540
        %v1829 = vunpack.c.l.b16 %v1541
        %v1830 = vunpack.c.l.b16 %v1542
        %v1831 = vunpack.c.l.b16 %v1543
        %v1832 = vunpack.c.l.b16 %v1544
        %v1833 = vunpack.c.l.b16 %v1545
        %v1834 = vunpack.c.l.b16 %v1546
        %v1835 = vunpack.c.l.b16 %v1547
        %v1836 = vunpack.c.l.b16 %v1548
        %v1837 = vunpack.c.l.b16 %v1549
        %v1838 = vunpack.c.l.b16 %v1550
        %v1839 = vunpack.c.l.b16 %v1551
        %v1840 = vunpack.c.l.b16 %v1552
        %v1841 = vunpack.c.l.b16 %v1553
        %v1842 = vunpack.c.l.b16 %v1554
        %v1843 = vunpack.c.l.b16 %v1555
        %v1844 = vunpack.c.l.b16 %v1556
        %v1845 = vunpack.c.l.b16 %v1557
        %v1846 = vunpack.c.l.b16 %v1558
        %v1847 = vunpack.c.l.b16 %v1559
        %v1848 = vunpack.c.l.b16 %v1560
        %v1849 = vunpack.c.l.b16 %v1561
        %v1850 = vunpack.c.l.b16 %v1562
        %v1851 = vunpack.c.l.b16 %v1563
        %v1852 = vunpack.c.l.b16 %v1564
        %v1853 = vunpack.c.l.b16 %v1565
        %v1854 = vunpack.c.l.b16 %v1566
        %v1855 = vunpack.c.l.b16 %v1567
        %v1856 = vunpack.c.l.b16 %v1568
        %v1857 = vunpack.c.l.b16 %v1569
        %v1858 = vunpack.c.l.b16 %v1570
        %v1859 = vunpack.c.l.b16 %v1571
        %v1860 = vunpack.c.l.b16 %v1572
        %v1861 = vunpack.c.l.b16 %v1573
        %v1862 = vunpack.c.l.b16 %v1574
        %v1863 = vunpack.c.l.b16 %v1575
        %v1864 = vunpack.c.l.b16 %v1576
        %v1865 = vunpack.c.l.b16 %v1577
        %v1866 = vunpack.c.l.b16 %v1578
        %v1867 = vunpack.c.l.b16 %v1579
        %v1868 = vunpack.c.l.b16 %v1580
        %v1869 = vunpack.c.l.b16 %v1581
        %v1870 = vunpack.c.l.b16 %v1582
        %v1871 = vunpack.c.l.b16 %v1583
        %v1872 = vunpack.c.l.b16 %v1584
        %v1873 = vunpack.c.l.b16 %v1585
        %v1874 = vunpack.c.l.b16 %v1586
        %v1875 = vunpack.c.l.b16 %v1587
        %v1876 = vunpack.c.l.b16 %v1588
        %v1877 = vunpack.c.l.b16 %v1589
        %v1878 = vunpack.c.l.b16 %v1590
        %v1879 = vunpack.c.l.b16 %v1591
        %v1880 = vunpack.c.l.b16 %v1592
        %v1881 = vunpack.c.l.b16 %v1593
        %v1882 = vunpack.c.l.b16 %v1594
        %v1883 = vunpack.c.l.b16 %v1595
        %v1884 = vunpack.c.l.b16 %v1596
        %v1885 = vunpack.c.l.b16 %v1597
        %v1886 = vunpack.c.l.b16 %v1598
        %v1887 = vunpack.c.l.b16 %v1599
        %v1888 = vunpack.c.l.b16 %v1600
        %v1889 = vunpack.c.l.b16 %v1601
        %v1890 = vunpack.c.l.b16 %v1602
        %v1891 = vunpack.c.l.b16 %v1603
        %v1892 = vunpack.c.l.b16 %v1604
        %v1893 = vunpack.c.l.b16 %v1605
        %v1894 = vunpack.c.l.b16 %v1606
        %v1895 = vunpack.c.l.b16 %v1607
        %v1896 = vunpack.c.l.b16 %v1608
        %v1897 = vunpack.c.l.b16 %v1609
        %v1898 = vunpack.c.l.b16 %v1610
        %v1899 = vunpack.c.l.b16 %v1611
        %v1900 = vunpack.c.l.b16 %v1612
        %v1901 = vunpack.c.l.b16 %v1613
        %v1902 = vunpack.c.l.b16 %v1614
        %v1903 = vunpack.c.l.b16 %v1615
        %v1904 = vunpack.c.l.b16 %v1616
        %v1905 = vunpack.c.l.b16 %v1617
        %v1906 = vunpack.c.l.b16 %v1618
        %v1907 = vunpack.c.l.b16 %v1619
        %v1908 = vunpack.c.l.b16 %v1620
        %v1909 = vunpack.c.l.b16 %v1621
        %v1910 = vunpack.c.l.b16 %v1622
        %v1911 = vunpack.c.l.b16 %v1623
        %v1912 = vunpack.c.l.b16 %v1624
        %v1913 = vunpack.c.l.b16 %v1625
        %v1914 = vunpack.c.l.b16 %v1626
        %v1915 = vunpack.c.l.b16 %v1627
        %v1916 = vunpack.c.l.b16 %v1628
        %v1917 = vunpack.c.l.b16 %v1629
        %v1918 = vunpack.c.l.b16 %v1630
        %v1919 = vunpack.c.l.b16 %v1631
        %v1920 = vunpack.c.l.b16 %v1632
        %v1921 = vunpack.c.l.b16 %v1633
        %v1922 = vunpack.c.l.b16 %v1634
        %v1923 = vunpack.c.l.b16 %v1635
        %v1924 = vunpack.c.l.b16 %v1636
        %v1925 = vunpack.c.l.b16 %v1637
        %v1926 = vunpack.c.l.b16 %v1638
        %v1927 = vunpack.c.l.b16 %v1639
        %v1928 = vunpack.c.l.b16 %v1640
        %v1929 = vunpack.c.l.b16 %v1641
        %v1930 = vunpack.c.l.b16 %v1642
        %v1931 = vunpack.c.l.b16 %v1643
        %v1932 = vunpack.c.l.b16 %v1644
        %v1933 = vunpack.c.l.b16 %v1645
        %v1934 = vunpack.c.l.b16 %v1646
        %v1935 = vunpack.c.l.b16 %v1647
        %v1936 = vunpack.c.l.b16 %v1648
        %v1937 = vunpack.c.l.b16 %v1649
        %v1938 = vunpack.c.l.b16 %v1650
        %v1939 = vunpack.c.l.b16 %v1651
        %v1940 = vunpack.c.l.b16 %v1652
        %v1941 = vunpack.c.l.b16 %v1653
        %v1942 = vunpack.c.l.b16 %v1654
        %v1943 = vunpack.c.l.b16 %v1655
        %v1944 = vunpack.c.l.b16 %v1656
        %v1945 = vunpack.c.l.b16 %v1657
        %v1946 = vunpack.c.l.b16 %v1658
        %v1947 = vunpack.c.l.b16 %v1659
        %v1948 = vunpack.c.l.b16 %v1660
        %v1949 = vpack.c.b16 %v1806, %v1805
        %v1950 = vpack.c.b16 %v1808, %v1807
        %v1951 = vpack.c.b16 %v1810, %v1809
        %v1952 = vpack.c.b16 %v1812, %v1811
        %v1953 = vpack.c.b16 %v1814, %v1813
        %v1954 = vpack.c.b16 %v1816, %v1815
        %v1955 = vpack.c.b16 %v1818, %v1817
        %v1956 = vpack.c.b16 %v1820, %v1819
        %v1957 = vpack.c.b16 %v1822, %v1821
        %v1958 = vpack.c.b16 %v1824, %v1823
        %v1959 = vpack.c.b16 %v1826, %v1825
        %v1960 = vpack.c.b16 %v1828, %v1827
        %v1961 = vpack.c.b16 %v1830, %v1829
        %v1962 = vpack.c.b16 %v1832, %v1831
        %v1963 = vpack.c.b16 %v1834, %v1833
        %v1964 = vpack.c.b16 %v1836, %v1835
        %v1965 = vpack.c.b16 %v1838, %v1837
        %v1966 = vpack.c.b16 %v1840, %v1839
        %v1967 = vpack.c.b16 %v1842, %v1841
        %v1968 = vpack.c.b16 %v1844, %v1843
        %v1969 = vpack.c.b16 %v1846, %v1845
        %v1970 = vpack.c.b16 %v1848, %v1847
        %v1971 = vpack.c.b16 %v1850, %v1849
        %v1972 = vpack.c.b16 %v1852, %v1851
        %v1973 = vpack.c.b16 %v1854, %v1853
        %v1974 = vpack.c.b16 %v1856, %v1855
        %v1975 = vpack.c.b16 %v1858, %v1857
        %v1976 = vpack.c.b16 %v1860, %v1859
        %v1977 = vpack.c.b16 %v1862, %v1861
        %v1978 = vpack.c.b16 %v1864, %v1863
        %v1979 = vpack.c.b16 %v1866, %v1865
        %v1980 = vpack.c.b16 %v1868, %v1867
        %v1981 = vpack.c.b16 %v1870, %v1869
        %v1982 = vpack.c.b16 %v1872, %v1871
        %v1983 = vpack.c.b16 %v1874, %v1873
        %v1984 = vpack.c.b16 %v1876, %v1875
        %v1985 = vpack.c.b16 %v1878, %v1877
        %v1986 = vpack.c.b16 %v1880, %v1879
        %v1987 = vpack.c.b16 %v1882, %v1881
        %v1988 = vpack.c.b16 %v1884, %v1883
        %v1989 = vpack.c.b16 %v1886, %v1885
        %v1990 = vpack.c.b16 %v1888, %v1887
        %v1991 = vpack.c.b16 %v1890, %v1889
        %v1992 = vpack.c.b16 %v1892, %v1891
        %v1993 = vpack.c.b16 %v1894, %v1893
        %v1994 = vpack.c.b16 %v1896, %v1895
        %v1995 = vpack.c.b16 %v1898, %v1897
        %v1996 = vpack.c.b16 %v1900, %v1899
        %v1997 = vpack.c.b16 %v1902, %v1901
        %v1998 = vpack.c.b16 %v1904, %v1903
        %v1999 = vpack.c.b16 %v1906, %v1905
        %v2000 = vpack.c.b16 %v1908, %v1907
        %v2001 = vpack.c.b16 %v1910, %v1909
        %v2002 = vpack.c.b16 %v1912, %v1911
        %v2003 = vpack.c.b16 %v1914, %v1913
        %v2004 = vpack.c.b16 %v1916, %v1915
        %v2005 = vpack.c.b16 %v1918, %v1917
        %v2006 = vpack.c.b16 %v1920, %v1919
        %v2007 = vpack.c.b16 %v1922, %v1921
        %v2008 = vpack.c.b16 %v1924, %v1923
        %v2009 = vpack.c.b16 %v1926, %v1925
        %v2010 = vpack.c.b16 %v1928, %v1927
        %v2011 = vpack.c.b16 %v1930, %v1929
        %v2012 = vpack.c.b16 %v1932, %v1931
        %v2013 = vpack.c.b16 %v1934, %v1933
        %v2014 = vpack.c.b16 %v1936, %v1935
        %v2015 = vpack.c.b16 %v1938, %v1937
        %v2016 = vpack.c.b16 %v1940, %v1939
        %v2017 = vpack.c.b16 %v1942, %v1941
        %v2018 = vpack.c.b16 %v1944, %v1943
        %v2019 = vpack.c.b16 %v1946, %v1945
        %v2020 = vpack.c.b16 %v1948, %v1947
        %2093 = vmatprep.subr.bf16.mxu0 0
        %2094 = vmatpush1.bf16.msra.mxu0 %v1956
        %2095 = vmatprep.subr.bf16.mxu0 0
        %2096 = vmatpush1.bf16.msra.mxu0 %v1955
        %2097 = vmatprep.subr.bf16.mxu0 0
        %2098 = vmatpush1.bf16.msra.mxu0 %v1954
        %2099 = vmatprep.subr.bf16.mxu0 0
        %2100 = vmatpush1.bf16.msra.mxu0 %v1953
        %2101 = vmatprep.subr.bf16.mxu0 0
        %2102 = vmatpush1.bf16.msra.mxu0 %v1952
        %2103 = vmatprep.subr.bf16.mxu0 0
        %2104 = vmatpush1.bf16.msra.mxu0 %v1951
        %2105 = vmatprep.subr.bf16.mxu0 0
        %2106 = vmatpush1.bf16.msra.mxu0 %v1950
        %2107 = vmatprep.subr.bf16.mxu0 0
        %2108 = vmatpush1.bf16.msra.mxu0 %v1949
        %2109 = vmatprep.subr.bf16.mxu0 0
        %2110 = vmatpush2.bf16.msra.mxu0 %v1964
        %2111 = vmatprep.subr.bf16.mxu0 0
        %2112 = vmatpush2.bf16.msra.mxu0 %v1963
        %2113 = vmatprep.subr.bf16.mxu0 0
        %2114 = vmatpush2.bf16.msra.mxu0 %v1962
        %2115 = vmatprep.subr.bf16.mxu0 0
        %2116 = vmatpush2.bf16.msra.mxu0 %v1961
        %2117 = vmatprep.subr.bf16.mxu0 0
        %2118 = vmatpush2.bf16.msra.mxu0 %v1960
        %2119 = vmatprep.subr.bf16.mxu0 0
        %2120 = vmatpush2.bf16.msra.mxu0 %v1959
        %2121 = vmatprep.subr.bf16.mxu0 0
        %2122 = vmatpush2.bf16.msra.mxu0 %v1958
        %2123 = vmatprep.subr.bf16.mxu0 0
        %2124 = vmatpush2.bf16.msra.mxu0 %v1957
        %2125 = vmatprep.mubr.bf16.mxu0 %v689
        %2126 = vmatmul.mubr.bf16.gmra.mxu0 %v572
        %v2127 = vpop.f32.mrf.mxu0
        %v2128 = vadd.f32 0.0, %v2127
        %v2129 = vpop.f32.mrf.mxu0
        %v2130 = vpop.f32.mrf.mxu0
        %v2131 = vadd.f32 0.0, %v2130
        %v2132 = vpop.f32.mrf.mxu0
        %2133 = vmatprep.mubr.bf16.mxu0 %v690
        %2134 = vmatmul.mubr.bf16.gmra.mxu0 %v573
        %v2135 = vpop.f32.mrf.mxu0
        %v2136 = vadd.f32 0.0, %v2135
        %v2137 = vpop.f32.mrf.mxu0
        %v2138 = vpop.f32.mrf.mxu0
        %v2139 = vadd.f32 0.0, %v2138
        %v2140 = vpop.f32.mrf.mxu0
        %2141 = vmatprep.mubr.bf16.mxu0 %v691
        %2142 = vmatmul.mubr.bf16.gmra.mxu0 %v574
        %v2143 = vpop.f32.mrf.mxu0
        %v2144 = vadd.f32 0.0, %v2143
        %v2145 = vpop.f32.mrf.mxu0
        %v2146 = vpop.f32.mrf.mxu0
        %v2147 = vadd.f32 0.0, %v2146
        %v2148 = vpop.f32.mrf.mxu0
        %2149 = vmatprep.mubr.bf16.mxu0 %v692
        %2150 = vmatmul.mubr.bf16.gmra.mxu0 %v575
        %v2151 = vpop.f32.mrf.mxu0
        %v2152 = vadd.f32 0.0, %v2151
        %v2153 = vpop.f32.mrf.mxu0
        %v2154 = vpop.f32.mrf.mxu0
        %v2155 = vadd.f32 0.0, %v2154
        %v2156 = vpop.f32.mrf.mxu0
        %2157 = vmatprep.mubr.bf16.mxu0 %v693
        %2158 = vmatmul.mubr.bf16.gmra.mxu0 %v576
        %v2159 = vpop.f32.mrf.mxu0
        %v2160 = vadd.f32 0.0, %v2159
        %v2161 = vpop.f32.mrf.mxu0
        %v2162 = vpop.f32.mrf.mxu0
        %v2163 = vadd.f32 0.0, %v2162
        %v2164 = vpop.f32.mrf.mxu0
        %2165 = vmatprep.mubr.bf16.mxu0 %v694
        %2166 = vmatmul.mubr.bf16.gmra.mxu0 %v577
        %v2167 = vpop.f32.mrf.mxu0
        %v2168 = vadd.f32 0.0, %v2167
        %v2169 = vpop.f32.mrf.mxu0
        %v2170 = vpop.f32.mrf.mxu0
        %v2171 = vadd.f32 0.0, %v2170
        %v2172 = vpop.f32.mrf.mxu0
        %2173 = vmatprep.mubr.bf16.mxu0 %v695
        %2174 = vmatmul.mubr.bf16.gmra.mxu0 %v578
        %v2175 = vpop.f32.mrf.mxu0
        %v2176 = vadd.f32 0.0, %v2175
        %v2177 = vpop.f32.mrf.mxu0
        %v2178 = vpop.f32.mrf.mxu0
        %v2179 = vadd.f32 0.0, %v2178
        %v2180 = vpop.f32.mrf.mxu0
        %2181 = vmatprep.mubr.bf16.mxu0 %v696
        %2182 = vmatmul.mubr.bf16.gmra.mxu0 %v579
        %v2183 = vpop.f32.mrf.mxu0
        %v2184 = vadd.f32 0.0, %v2183
        %v2185 = vpop.f32.mrf.mxu0
        %v2186 = vpop.f32.mrf.mxu0
        %v2187 = vadd.f32 0.0, %v2186
        %v2188 = vpop.f32.mrf.mxu0
        %2189 = vmatprep.mubr.bf16.mxu0 %v697
        %2190 = vmatmul.mubr.bf16.gmra.mxu0 %v580
        %v2191 = vpop.f32.mrf.mxu0
        %v2192 = vadd.f32 0.0, %v2191
        %v2193 = vpop.f32.mrf.mxu0
        %v2194 = vpop.f32.mrf.mxu0
        %v2195 = vadd.f32 0.0, %v2194
        %v2196 = vpop.f32.mrf.mxu0
        %2197 = vdwg.mxu0
        %2198 = vmatprep.subr.bf16.mxu0 0
        %2199 = vmatpush1.bf16.msra.mxu0 %v1972
        %2200 = vmatprep.subr.bf16.mxu0 0
        %2201 = vmatpush1.bf16.msra.mxu0 %v1971
        %2202 = vmatprep.subr.bf16.mxu0 0
        %2203 = vmatpush1.bf16.msra.mxu0 %v1970
        %2204 = vmatprep.subr.bf16.mxu0 0
        %2205 = vmatpush1.bf16.msra.mxu0 %v1969
        %2206 = vmatprep.subr.bf16.mxu0 0
        %2207 = vmatpush1.bf16.msra.mxu0 %v1968
        %2208 = vmatprep.subr.bf16.mxu0 0
        %2209 = vmatpush1.bf16.msra.mxu0 %v1967
        %2210 = vmatprep.subr.bf16.mxu0 0
        %2211 = vmatpush1.bf16.msra.mxu0 %v1966
        %2212 = vmatprep.subr.bf16.mxu0 0
        %2213 = vmatpush1.bf16.msra.mxu0 %v1965
        %2214 = vmatprep.subr.bf16.mxu0 0
        %2215 = vmatpush2.bf16.msra.mxu0 %v1980
        %2216 = vmatprep.subr.bf16.mxu0 0
        %2217 = vmatpush2.bf16.msra.mxu0 %v1979
        %2218 = vmatprep.subr.bf16.mxu0 0
        %2219 = vmatpush2.bf16.msra.mxu0 %v1978
        %2220 = vmatprep.subr.bf16.mxu0 0
        %2221 = vmatpush2.bf16.msra.mxu0 %v1977
        %2222 = vmatprep.subr.bf16.mxu0 0
        %2223 = vmatpush2.bf16.msra.mxu0 %v1976
        %2224 = vmatprep.subr.bf16.mxu0 0
        %2225 = vmatpush2.bf16.msra.mxu0 %v1975
        %2226 = vmatprep.subr.bf16.mxu0 0
        %2227 = vmatpush2.bf16.msra.mxu0 %v1974
        %2228 = vmatprep.subr.bf16.mxu0 0
        %2229 = vmatpush2.bf16.msra.mxu0 %v1973
        %2230 = vmatprep.mubr.bf16.mxu0 %v923
        %2231 = vmatmul.mubr.bf16.gmra.mxu0 %v806
        %v2232 = vpop.f32.mrf.mxu0
        %v2233 = vadd.f32 %v2128, %v2232
        %v2234 = vpop.f32.mrf.mxu0
        %v2235 = vpop.f32.mrf.mxu0
        %v2236 = vadd.f32 %v2131, %v2235
        %v2237 = vpop.f32.mrf.mxu0
        %2238 = vmatprep.mubr.bf16.mxu0 %v924
        %2239 = vmatmul.mubr.bf16.gmra.mxu0 %v807
        %v2240 = vpop.f32.mrf.mxu0
        %v2241 = vadd.f32 %v2136, %v2240
        %v2242 = vpop.f32.mrf.mxu0
        %v2243 = vpop.f32.mrf.mxu0
        %v2244 = vadd.f32 %v2139, %v2243
        %v2245 = vpop.f32.mrf.mxu0
        %2246 = vmatprep.mubr.bf16.mxu0 %v925
        %2247 = vmatmul.mubr.bf16.gmra.mxu0 %v808
        %v2248 = vpop.f32.mrf.mxu0
        %v2249 = vadd.f32 %v2144, %v2248
        %v2250 = vpop.f32.mrf.mxu0
        %v2251 = vpop.f32.mrf.mxu0
        %v2252 = vadd.f32 %v2147, %v2251
        %v2253 = vpop.f32.mrf.mxu0
        %2254 = vmatprep.mubr.bf16.mxu0 %v926
        %2255 = vmatmul.mubr.bf16.gmra.mxu0 %v809
        %v2256 = vpop.f32.mrf.mxu0
        %v2257 = vadd.f32 %v2152, %v2256
        %v2258 = vpop.f32.mrf.mxu0
        %v2259 = vpop.f32.mrf.mxu0
        %v2260 = vadd.f32 %v2155, %v2259
        %v2261 = vpop.f32.mrf.mxu0
        %2262 = vmatprep.mubr.bf16.mxu0 %v927
        %2263 = vmatmul.mubr.bf16.gmra.mxu0 %v810
        %v2264 = vpop.f32.mrf.mxu0
        %v2265 = vadd.f32 %v2160, %v2264
        %v2266 = vpop.f32.mrf.mxu0
        %v2267 = vpop.f32.mrf.mxu0
        %v2268 = vadd.f32 %v2163, %v2267
        %v2269 = vpop.f32.mrf.mxu0
        %2270 = vmatprep.mubr.bf16.mxu0 %v928
        %2271 = vmatmul.mubr.bf16.gmra.mxu0 %v811
        %v2272 = vpop.f32.mrf.mxu0
        %v2273 = vadd.f32 %v2168, %v2272
        %v2274 = vpop.f32.mrf.mxu0
        %v2275 = vpop.f32.mrf.mxu0
        %v2276 = vadd.f32 %v2171, %v2275
        %v2277 = vpop.f32.mrf.mxu0
        %2278 = vmatprep.mubr.bf16.mxu0 %v929
        %2279 = vmatmul.mubr.bf16.gmra.mxu0 %v812
        %v2280 = vpop.f32.mrf.mxu0
        %v2281 = vadd.f32 %v2176, %v2280
        %v2282 = vpop.f32.mrf.mxu0
        %v2283 = vpop.f32.mrf.mxu0
        %v2284 = vadd.f32 %v2179, %v2283
        %v2285 = vpop.f32.mrf.mxu0
        %2286 = vmatprep.mubr.bf16.mxu0 %v930
        %2287 = vmatmul.mubr.bf16.gmra.mxu0 %v813
        %v2288 = vpop.f32.mrf.mxu0
        %v2289 = vadd.f32 %v2184, %v2288
        %v2290 = vpop.f32.mrf.mxu0
        %v2291 = vpop.f32.mrf.mxu0
        %v2292 = vadd.f32 %v2187, %v2291
        %v2293 = vpop.f32.mrf.mxu0
        %2294 = vmatprep.mubr.bf16.mxu0 %v931
        %2295 = vmatmul.mubr.bf16.gmra.mxu0 %v814
        %v2296 = vpop.f32.mrf.mxu0
        %v2297 = vadd.f32 %v2192, %v2296
        %v2298 = vpop.f32.mrf.mxu0
        %v2299 = vpop.f32.mrf.mxu0
        %v2300 = vadd.f32 %v2195, %v2299
        %v2301 = vpop.f32.mrf.mxu0
        %2302 = vdwg.mxu0
        %2303 = vmatprep.subr.bf16.mxu0 0
        %2304 = vmatpush1.bf16.msra.mxu0 %v1988
        %2305 = vmatprep.subr.bf16.mxu0 0
        %2306 = vmatpush1.bf16.msra.mxu0 %v1987
        %2307 = vmatprep.subr.bf16.mxu0 0
        %2308 = vmatpush1.bf16.msra.mxu0 %v1986
        %2309 = vmatprep.subr.bf16.mxu0 0
        %2310 = vmatpush1.bf16.msra.mxu0 %v1985
        %2311 = vmatprep.subr.bf16.mxu0 0
        %2312 = vmatpush1.bf16.msra.mxu0 %v1984
        %2313 = vmatprep.subr.bf16.mxu0 0
        %2314 = vmatpush1.bf16.msra.mxu0 %v1983
        %2315 = vmatprep.subr.bf16.mxu0 0
        %2316 = vmatpush1.bf16.msra.mxu0 %v1982
        %2317 = vmatprep.subr.bf16.mxu0 0
        %2318 = vmatpush1.bf16.msra.mxu0 %v1981
        %2319 = vmatprep.subr.bf16.mxu0 0
        %2320 = vmatpush2.bf16.msra.mxu0 %v1996
        %2321 = vmatprep.subr.bf16.mxu0 0
        %2322 = vmatpush2.bf16.msra.mxu0 %v1995
        %2323 = vmatprep.subr.bf16.mxu0 0
        %2324 = vmatpush2.bf16.msra.mxu0 %v1994
        %2325 = vmatprep.subr.bf16.mxu0 0
        %2326 = vmatpush2.bf16.msra.mxu0 %v1993
        %2327 = vmatprep.subr.bf16.mxu0 0
        %2328 = vmatpush2.bf16.msra.mxu0 %v1992
        %2329 = vmatprep.subr.bf16.mxu0 0
        %2330 = vmatpush2.bf16.msra.mxu0 %v1991
        %2331 = vmatprep.subr.bf16.mxu0 0
        %2332 = vmatpush2.bf16.msra.mxu0 %v1990
        %2333 = vmatprep.subr.bf16.mxu0 0
        %2334 = vmatpush2.bf16.msra.mxu0 %v1989
        %2335 = vmatprep.mubr.bf16.mxu0 %v1157
        %2336 = vmatmul.mubr.bf16.gmra.mxu0 %v1040
        %v2337 = vpop.f32.mrf.mxu0
        %v2338 = vadd.f32 %v2233, %v2337
        %v2339 = vpop.f32.mrf.mxu0
        %v2340 = vpop.f32.mrf.mxu0
        %v2341 = vadd.f32 %v2236, %v2340
        %v2342 = vpop.f32.mrf.mxu0
        %2343 = vmatprep.mubr.bf16.mxu0 %v1158
        %2344 = vmatmul.mubr.bf16.gmra.mxu0 %v1041
        %v2345 = vpop.f32.mrf.mxu0
        %v2346 = vadd.f32 %v2241, %v2345
        %v2347 = vpop.f32.mrf.mxu0
        %v2348 = vpop.f32.mrf.mxu0
        %v2349 = vadd.f32 %v2244, %v2348
        %v2350 = vpop.f32.mrf.mxu0
        %2351 = vmatprep.mubr.bf16.mxu0 %v1159
        %2352 = vmatmul.mubr.bf16.gmra.mxu0 %v1042
        %v2353 = vpop.f32.mrf.mxu0
        %v2354 = vadd.f32 %v2249, %v2353
        %v2355 = vpop.f32.mrf.mxu0
        %v2356 = vpop.f32.mrf.mxu0
        %v2357 = vadd.f32 %v2252, %v2356
        %v2358 = vpop.f32.mrf.mxu0
        %2359 = vmatprep.mubr.bf16.mxu0 %v1160
        %2360 = vmatmul.mubr.bf16.gmra.mxu0 %v1043
        %v2361 = vpop.f32.mrf.mxu0
        %v2362 = vadd.f32 %v2257, %v2361
        %v2363 = vpop.f32.mrf.mxu0
        %v2364 = vpop.f32.mrf.mxu0
        %v2365 = vadd.f32 %v2260, %v2364
        %v2366 = vpop.f32.mrf.mxu0
        %2367 = vmatprep.mubr.bf16.mxu0 %v1161
        %2368 = vmatmul.mubr.bf16.gmra.mxu0 %v1044
        %v2369 = vpop.f32.mrf.mxu0
        %v2370 = vadd.f32 %v2265, %v2369
        %v2371 = vpop.f32.mrf.mxu0
        %v2372 = vpop.f32.mrf.mxu0
        %v2373 = vadd.f32 %v2268, %v2372
        %v2374 = vpop.f32.mrf.mxu0
        %2375 = vmatprep.mubr.bf16.mxu0 %v1162
        %2376 = vmatmul.mubr.bf16.gmra.mxu0 %v1045
        %v2377 = vpop.f32.mrf.mxu0
        %v2378 = vadd.f32 %v2273, %v2377
        %v2379 = vpop.f32.mrf.mxu0
        %v2380 = vpop.f32.mrf.mxu0
        %v2381 = vadd.f32 %v2276, %v2380
        %v2382 = vpop.f32.mrf.mxu0
        %2383 = vmatprep.mubr.bf16.mxu0 %v1163
        %2384 = vmatmul.mubr.bf16.gmra.mxu0 %v1046
        %v2385 = vpop.f32.mrf.mxu0
        %v2386 = vadd.f32 %v2281, %v2385
        %v2387 = vpop.f32.mrf.mxu0
        %v2388 = vpop.f32.mrf.mxu0
        %v2389 = vadd.f32 %v2284, %v2388
        %v2390 = vpop.f32.mrf.mxu0
        %2391 = vmatprep.mubr.bf16.mxu0 %v1164
        %2392 = vmatmul.mubr.bf16.gmra.mxu0 %v1047
        %v2393 = vpop.f32.mrf.mxu0
        %v2394 = vadd.f32 %v2289, %v2393
        %v2395 = vpop.f32.mrf.mxu0
        %v2396 = vpop.f32.mrf.mxu0
        %v2397 = vadd.f32 %v2292, %v2396
        %v2398 = vpop.f32.mrf.mxu0
        %2399 = vmatprep.mubr.bf16.mxu0 %v1165
        %2400 = vmatmul.mubr.bf16.gmra.mxu0 %v1048
        %v2401 = vpop.f32.mrf.mxu0
        %v2402 = vadd.f32 %v2297, %v2401
        %v2403 = vpop.f32.mrf.mxu0
        %v2404 = vpop.f32.mrf.mxu0
        %v2405 = vadd.f32 %v2300, %v2404
        %v2406 = vpop.f32.mrf.mxu0
        %2407 = vdwg.mxu0
        %2408 = vmatprep.subr.bf16.mxu0 0
        %2409 = vmatpush1.bf16.msra.mxu0 %v2004
        %2410 = vmatprep.subr.bf16.mxu0 0
        %2411 = vmatpush1.bf16.msra.mxu0 %v2003
        %2412 = vmatprep.subr.bf16.mxu0 0
        %2413 = vmatpush1.bf16.msra.mxu0 %v2002
        %2414 = vmatprep.subr.bf16.mxu0 0
        %2415 = vmatpush1.bf16.msra.mxu0 %v2001
        %2416 = vmatprep.subr.bf16.mxu0 0
        %2417 = vmatpush1.bf16.msra.mxu0 %v2000
        %2418 = vmatprep.subr.bf16.mxu0 0
        %2419 = vmatpush1.bf16.msra.mxu0 %v1999
        %2420 = vmatprep.subr.bf16.mxu0 0
        %2421 = vmatpush1.bf16.msra.mxu0 %v1998
        %2422 = vmatprep.subr.bf16.mxu0 0
        %2423 = vmatpush1.bf16.msra.mxu0 %v1997
        %2424 = vmatprep.subr.bf16.mxu0 0
        %2425 = vmatpush2.bf16.msra.mxu0 %v2012
        %2426 = vmatprep.subr.bf16.mxu0 0
        %2427 = vmatpush2.bf16.msra.mxu0 %v2011
        %2428 = vmatprep.subr.bf16.mxu0 0
        %2429 = vmatpush2.bf16.msra.mxu0 %v2010
        %2430 = vmatprep.subr.bf16.mxu0 0
        %2431 = vmatpush2.bf16.msra.mxu0 %v2009
        %2432 = vmatprep.subr.bf16.mxu0 0
        %2433 = vmatpush2.bf16.msra.mxu0 %v2008
        %2434 = vmatprep.subr.bf16.mxu0 0
        %2435 = vmatpush2.bf16.msra.mxu0 %v2007
        %2436 = vmatprep.subr.bf16.mxu0 0
        %2437 = vmatpush2.bf16.msra.mxu0 %v2006
        %2438 = vmatprep.subr.bf16.mxu0 0
        %2439 = vmatpush2.bf16.msra.mxu0 %v2005
        %2440 = vmatprep.mubr.bf16.mxu0 %v1391
        %2441 = vmatmul.mubr.bf16.gmra.mxu0 %v1274
        %v2442 = vpop.f32.mrf.mxu0
        %v2443 = vadd.f32 %v2338, %v2442
        %v2444 = vpop.f32.mrf.mxu0
        %v2445 = vpop.f32.mrf.mxu0
        %v2446 = vadd.f32 %v2341, %v2445
        %v2447 = vpop.f32.mrf.mxu0
        %2448 = vmatprep.mubr.bf16.mxu0 %v1392
        %2449 = vmatmul.mubr.bf16.gmra.mxu0 %v1275
        %v2450 = vpop.f32.mrf.mxu0
        %v2451 = vadd.f32 %v2346, %v2450
        %v2452 = vpop.f32.mrf.mxu0
        %v2453 = vpop.f32.mrf.mxu0
        %v2454 = vadd.f32 %v2349, %v2453
        %v2455 = vpop.f32.mrf.mxu0
        %2456 = vmatprep.mubr.bf16.mxu0 %v1393
        %2457 = vmatmul.mubr.bf16.gmra.mxu0 %v1276
        %v2458 = vpop.f32.mrf.mxu0
        %v2459 = vadd.f32 %v2354, %v2458
        %v2460 = vpop.f32.mrf.mxu0
        %v2461 = vpop.f32.mrf.mxu0
        %v2462 = vadd.f32 %v2357, %v2461
        %v2463 = vpop.f32.mrf.mxu0
        %2464 = vmatprep.mubr.bf16.mxu0 %v1394
        %2465 = vmatmul.mubr.bf16.gmra.mxu0 %v1277
        %v2466 = vpop.f32.mrf.mxu0
        %v2467 = vadd.f32 %v2362, %v2466
        %v2468 = vpop.f32.mrf.mxu0
        %v2469 = vpop.f32.mrf.mxu0
        %v2470 = vadd.f32 %v2365, %v2469
        %v2471 = vpop.f32.mrf.mxu0
        %2472 = vmatprep.mubr.bf16.mxu0 %v1395
        %2473 = vmatmul.mubr.bf16.gmra.mxu0 %v1278
        %v2474 = vpop.f32.mrf.mxu0
        %v2475 = vadd.f32 %v2370, %v2474
        %v2476 = vpop.f32.mrf.mxu0
        %v2477 = vpop.f32.mrf.mxu0
        %v2478 = vadd.f32 %v2373, %v2477
        %v2479 = vpop.f32.mrf.mxu0
        %2480 = vmatprep.mubr.bf16.mxu0 %v1396
        %2481 = vmatmul.mubr.bf16.gmra.mxu0 %v1279
        %v2482 = vpop.f32.mrf.mxu0
        %v2483 = vadd.f32 %v2378, %v2482
        %v2484 = vpop.f32.mrf.mxu0
        %v2485 = vpop.f32.mrf.mxu0
        %v2486 = vadd.f32 %v2381, %v2485
        %v2487 = vpop.f32.mrf.mxu0
        %2488 = vmatprep.mubr.bf16.mxu0 %v1397
        %2489 = vmatmul.mubr.bf16.gmra.mxu0 %v1280
        %v2490 = vpop.f32.mrf.mxu0
        %v2491 = vadd.f32 %v2386, %v2490
        %v2492 = vpop.f32.mrf.mxu0
        %v2493 = vpop.f32.mrf.mxu0
        %v2494 = vadd.f32 %v2389, %v2493
        %v2495 = vpop.f32.mrf.mxu0
        %2496 = vmatprep.mubr.bf16.mxu0 %v1398
        %2497 = vmatmul.mubr.bf16.gmra.mxu0 %v1281
        %v2498 = vpop.f32.mrf.mxu0
        %v2499 = vadd.f32 %v2394, %v2498
        %v2500 = vpop.f32.mrf.mxu0
        %v2501 = vpop.f32.mrf.mxu0
        %v2502 = vadd.f32 %v2397, %v2501
        %v2503 = vpop.f32.mrf.mxu0
        %2504 = vmatprep.mubr.bf16.mxu0 %v1399
        %2505 = vmatmul.mubr.bf16.gmra.mxu0 %v1282
        %v2506 = vpop.f32.mrf.mxu0
        %v2507 = vadd.f32 %v2402, %v2506
        %v2508 = vpop.f32.mrf.mxu0
        %v2509 = vpop.f32.mrf.mxu0
        %v2510 = vadd.f32 %v2405, %v2509
        %v2511 = vpop.f32.mrf.mxu0
        %2512 = vdwg.mxu0
        %2513 = vmatprep.subr.bf16.mxu0 0
        %2514 = vmatpush1.bf16.msra.mxu0 %v2020
        %2515 = vmatprep.subr.bf16.mxu0 0
        %2516 = vmatpush1.bf16.msra.mxu0 %v2019
        %2517 = vmatprep.subr.bf16.mxu0 0
        %2518 = vmatpush1.bf16.msra.mxu0 %v2018
        %2519 = vmatprep.subr.bf16.mxu0 0
        %2520 = vmatpush1.bf16.msra.mxu0 %v2017
        %2521 = vmatprep.subr.bf16.mxu0 0
        %2522 = vmatpush1.bf16.msra.mxu0 %v2016
        %2523 = vmatprep.subr.bf16.mxu0 0
        %2524 = vmatpush1.bf16.msra.mxu0 %v2015
        %2525 = vmatprep.subr.bf16.mxu0 0
        %2526 = vmatpush1.bf16.msra.mxu0 %v2014
        %2527 = vmatprep.subr.bf16.mxu0 0
        %2528 = vmatpush1.bf16.msra.mxu0 %v2013
        %2529 = vmatprep.subr.bf16.mxu0 0
        %2530 = vmatpush2.bf16.msra.mxu0 0
        %2531 = vmatprep.subr.bf16.mxu0 0
        %2532 = vmatpush2.bf16.msra.mxu0 0
        %2533 = vmatprep.subr.bf16.mxu0 0
        %2534 = vmatpush2.bf16.msra.mxu0 0
        %2535 = vmatprep.subr.bf16.mxu0 0
        %2536 = vmatpush2.bf16.msra.mxu0 0
        %2537 = vmatprep.subr.bf16.mxu0 0
        %2538 = vmatpush2.bf16.msra.mxu0 0
        %2539 = vmatprep.subr.bf16.mxu0 0
        %2540 = vmatpush2.bf16.msra.mxu0 0
        %2541 = vmatprep.subr.bf16.mxu0 0
        %2542 = vmatpush2.bf16.msra.mxu0 0
        %2543 = vmatprep.subr.bf16.mxu0 0
        %2544 = vmatpush2.bf16.msra.mxu0 0
        %2545 = vmatprep.mubr.bf16.mxu0 0
        %2546 = vmatmul.mubr.bf16.gmra.mxu0 %v1508
        %v2547 = vpop.f32.mrf.mxu0
        %v2548 = vadd.f32 %v2443, %v2547
        %v2549 = vpop.f32.mrf.mxu0
        %v2550 = vpop.f32.mrf.mxu0
        %v2551 = vadd.f32 %v2446, %v2550
        %v2552 = vpop.f32.mrf.mxu0
        %2553 = vmatprep.mubr.bf16.mxu0 0
        %2554 = vmatmul.mubr.bf16.gmra.mxu0 %v1509
        %v2555 = vpop.f32.mrf.mxu0
        %v2556 = vadd.f32 %v2451, %v2555
        %v2557 = vpop.f32.mrf.mxu0
        %v2558 = vpop.f32.mrf.mxu0
        %v2559 = vadd.f32 %v2454, %v2558
        %v2560 = vpop.f32.mrf.mxu0
        %2561 = vmatprep.mubr.bf16.mxu0 0
        %2562 = vmatmul.mubr.bf16.gmra.mxu0 %v1510
        %v2563 = vpop.f32.mrf.mxu0
        %v2564 = vadd.f32 %v2459, %v2563
        %v2565 = vpop.f32.mrf.mxu0
        %v2566 = vpop.f32.mrf.mxu0
        %v2567 = vadd.f32 %v2462, %v2566
        %v2568 = vpop.f32.mrf.mxu0
        %2569 = vmatprep.mubr.bf16.mxu0 0
        %2570 = vmatmul.mubr.bf16.gmra.mxu0 %v1511
        %v2571 = vpop.f32.mrf.mxu0
        %v2572 = vadd.f32 %v2467, %v2571
        %v2573 = vpop.f32.mrf.mxu0
        %v2574 = vpop.f32.mrf.mxu0
        %v2575 = vadd.f32 %v2470, %v2574
        %v2576 = vpop.f32.mrf.mxu0
        %2577 = vmatprep.mubr.bf16.mxu0 0
        %2578 = vmatmul.mubr.bf16.gmra.mxu0 %v1512
        %v2579 = vpop.f32.mrf.mxu0
        %v2580 = vadd.f32 %v2475, %v2579
        %v2581 = vpop.f32.mrf.mxu0
        %v2582 = vpop.f32.mrf.mxu0
        %v2583 = vadd.f32 %v2478, %v2582
        %v2584 = vpop.f32.mrf.mxu0
        %2585 = vmatprep.mubr.bf16.mxu0 0
        %2586 = vmatmul.mubr.bf16.gmra.mxu0 %v1513
        %v2587 = vpop.f32.mrf.mxu0
        %v2588 = vadd.f32 %v2483, %v2587
        %v2589 = vpop.f32.mrf.mxu0
        %v2590 = vpop.f32.mrf.mxu0
        %v2591 = vadd.f32 %v2486, %v2590
        %v2592 = vpop.f32.mrf.mxu0
        %2593 = vmatprep.mubr.bf16.mxu0 0
        %2594 = vmatmul.mubr.bf16.gmra.mxu0 %v1514
        %v2595 = vpop.f32.mrf.mxu0
        %v2596 = vadd.f32 %v2491, %v2595
        %v2597 = vpop.f32.mrf.mxu0
        %v2598 = vpop.f32.mrf.mxu0
        %v2599 = vadd.f32 %v2494, %v2598
        %v2600 = vpop.f32.mrf.mxu0
        %2601 = vmatprep.mubr.bf16.mxu0 0
        %2602 = vmatmul.mubr.bf16.gmra.mxu0 %v1515
        %v2603 = vpop.f32.mrf.mxu0
        %v2604 = vadd.f32 %v2499, %v2603
        %v2605 = vpop.f32.mrf.mxu0
        %v2606 = vpop.f32.mrf.mxu0
        %v2607 = vadd.f32 %v2502, %v2606
        %v2608 = vpop.f32.mrf.mxu0
        %2609 = vmatprep.mubr.bf16.mxu0 0
        %2610 = vmatmul.mubr.bf16.gmra.mxu0 %v1516
        %v2611 = vpop.f32.mrf.mxu0
        %v2612 = vadd.f32 %v2507, %v2611
        %v2613 = vpop.f32.mrf.mxu0
        %v2614 = vpop.f32.mrf.mxu0
        %v2615 = vadd.f32 %v2510, %v2614
        %v2616 = vpop.f32.mrf.mxu0
        %2617 = vdwg.mxu0
        %v2618 = vld [vmem:[%s257] sm:$0x1]
        %v2620 = vlaneseq
        %v2621 = vshrl.u32 %v2620, 7
        %v2622 = vsub.s32 0, %v2621
        %v2623 = vrot.slane %v2618, %v2622
        %v2625 = vmul.f32 %v2548, %v2623
        %v2626 = vmul.f32 %v2551, %v2623
        %v2627 = vmul.f32 %v2556, %v2623
        %v2628 = vmul.f32 %v2559, %v2623
        %v2629 = vmul.f32 %v2564, %v2623
        %v2630 = vmul.f32 %v2567, %v2623
        %v2631 = vmul.f32 %v2572, %v2623
        %v2632 = vmul.f32 %v2575, %v2623
        %v2633 = vmul.f32 %v2580, %v2623
        %v2634 = vmul.f32 %v2583, %v2623
        %v2635 = vmul.f32 %v2588, %v2623
        %v2636 = vmul.f32 %v2591, %v2623
        %v2637 = vmul.f32 %v2596, %v2623
        %v2638 = vmul.f32 %v2599, %v2623
        %v2639 = vmul.f32 %v2604, %v2623
        %v2640 = vmul.f32 %v2607, %v2623
        %v2641 = vmul.f32 %v2612, %v2623
        %v2642 = vmul.f32 %v2615, %v2623
        %v2643 = vld [vmem:[%s265] sm:$0x1]
        %v2645 = vlaneseq
        %v2646 = vshrl.u32 %v2645, 7
        %v2647 = vsub.s32 0, %v2646
        %v2648 = vrot.slane %v2643, %v2647
        %v2650 = vadd.f32 %v2625, %v2648
        %v2651 = vadd.f32 %v2626, %v2648
        %v2652 = vadd.f32 %v2627, %v2648
        %v2653 = vadd.f32 %v2628, %v2648
        %v2654 = vadd.f32 %v2629, %v2648
        %v2655 = vadd.f32 %v2630, %v2648
        %v2656 = vadd.f32 %v2631, %v2648
        %v2657 = vadd.f32 %v2632, %v2648
        %v2658 = vadd.f32 %v2633, %v2648
        %v2659 = vadd.f32 %v2634, %v2648
        %v2660 = vadd.f32 %v2635, %v2648
        %v2661 = vadd.f32 %v2636, %v2648
        %v2662 = vadd.f32 %v2637, %v2648
        %v2663 = vadd.f32 %v2638, %v2648
        %v2664 = vadd.f32 %v2639, %v2648
        %v2665 = vadd.f32 %v2640, %v2648
        %v2666 = vadd.f32 %v2641, %v2648
        %v2667 = vadd.f32 %v2642, %v2648
        %p2668 = scmp.eq.s32.totalorder %s385, 0
        %p2669 = scmp.gt.s32.totalorder %s22, 0
        %p2670 = pnand %p2668, %p2669
        %p2671 = pneg %p2670
        %v2672 = vld [vmem:[#allocation3] sm:$0xff]
        %v2673 = vld [vmem:[#allocation3 + $0x8] sm:$0xff]
        %v2674 = vld [vmem:[#allocation3 + $0x10] sm:$0xff]
        %v2675 = vld [vmem:[#allocation3 + $0x18] sm:$0xff]
        %v2676 = vld [vmem:[#allocation3 + $0x20] sm:$0xff]
        %v2677 = vld [vmem:[#allocation3 + $0x28] sm:$0xff]
        %v2678 = vld [vmem:[#allocation3 + $0x30] sm:$0xff]
        %v2679 = vld [vmem:[#allocation3 + $0x38] sm:$0xff]
        %v2680 = vld [vmem:[#allocation3 + $0x40] sm:$0xff]
        %v2681 = vld [vmem:[#allocation3 + $0x48] sm:$0xff]
        %v2682 = vld [vmem:[#allocation3 + $0x50] sm:$0xff]
        %v2683 = vld [vmem:[#allocation3 + $0x58] sm:$0xff]
        %v2684 = vld [vmem:[#allocation3 + $0x60] sm:$0xff]
        %v2685 = vld [vmem:[#allocation3 + $0x68] sm:$0xff]
        %v2686 = vld [vmem:[#allocation3 + $0x70] sm:$0xff]
        %v2687 = vld [vmem:[#allocation3 + $0x78] sm:$0xff]
        %v2688 = vld [vmem:[#allocation3 + $0x80] sm:$0xff]
        %v2689 = vld [vmem:[#allocation3 + $0x88] sm:$0xff]
        %v2690 = vadd.f32 %v2650, %v2672
        %v2691 = vadd.f32 %v2651, %v2673
        %v2692 = vadd.f32 %v2652, %v2674
        %v2693 = vadd.f32 %v2653, %v2675
        %v2694 = vadd.f32 %v2654, %v2676
        %v2695 = vadd.f32 %v2655, %v2677
        %v2696 = vadd.f32 %v2656, %v2678
        %v2697 = vadd.f32 %v2657, %v2679
        %v2698 = vadd.f32 %v2658, %v2680
        %v2699 = vadd.f32 %v2659, %v2681
        %v2700 = vadd.f32 %v2660, %v2682
        %v2701 = vadd.f32 %v2661, %v2683
        %v2702 = vadd.f32 %v2662, %v2684
        %v2703 = vadd.f32 %v2663, %v2685
        %v2704 = vadd.f32 %v2664, %v2686
        %v2705 = vadd.f32 %v2665, %v2687
        %v2706 = vadd.f32 %v2666, %v2688
        %v2707 = vadd.f32 %v2667, %v2689
        %s2708 = scalar_select %p2671, 1, 0
        %v2709 = vstv %s2708
        %vm2710 = vcmp.eq.s32.totalorder %v2709, 1
        %v2711 = vsel %vm2710, %v2690, %v2650
        %v2712 = vsel %vm2710, %v2691, %v2651
        %v2713 = vsel %vm2710, %v2692, %v2652
        %v2714 = vsel %vm2710, %v2693, %v2653
        %v2715 = vsel %vm2710, %v2694, %v2654
        %v2716 = vsel %vm2710, %v2695, %v2655
        %v2717 = vsel %vm2710, %v2696, %v2656
        %v2718 = vsel %vm2710, %v2697, %v2657
        %v2719 = vsel %vm2710, %v2698, %v2658
        %v2720 = vsel %vm2710, %v2699, %v2659
        %v2721 = vsel %vm2710, %v2700, %v2660
        %v2722 = vsel %vm2710, %v2701, %v2661
        %v2723 = vsel %vm2710, %v2702, %v2662
        %v2724 = vsel %vm2710, %v2703, %v2663
        %v2725 = vsel %vm2710, %v2704, %v2664
        %v2726 = vsel %vm2710, %v2705, %v2665
        %v2727 = vsel %vm2710, %v2706, %v2666
        %v2728 = vsel %vm2710, %v2707, %v2667
        %v2729 = vmax.f32 %v2711, 0.0
        %v2730 = vmax.f32 %v2712, 0.0
        %v2731 = vmax.f32 %v2713, 0.0
        %v2732 = vmax.f32 %v2714, 0.0
        %v2733 = vmax.f32 %v2715, 0.0
        %v2734 = vmax.f32 %v2716, 0.0
        %v2735 = vmax.f32 %v2717, 0.0
        %v2736 = vmax.f32 %v2718, 0.0
        %v2737 = vmax.f32 %v2719, 0.0
        %v2738 = vmax.f32 %v2720, 0.0
        %v2739 = vmax.f32 %v2721, 0.0
        %v2740 = vmax.f32 %v2722, 0.0
        %v2741 = vmax.f32 %v2723, 0.0
        %v2742 = vmax.f32 %v2724, 0.0
        %v2743 = vmax.f32 %v2725, 0.0
        %v2744 = vmax.f32 %v2726, 0.0
        %v2745 = vmax.f32 %v2727, 0.0
        %v2746 = vmax.f32 %v2728, 0.0
        %s2747 = scalar_select %p387, 1, 0
        %v2748 = vstv %s2747
        %vm2749 = vcmp.eq.s32.totalorder %v2748, 1
        %v2750 = vsel %vm2749, %v2729, %v2711
        %v2751 = vsel %vm2749, %v2730, %v2712
        %v2752 = vsel %vm2749, %v2731, %v2713
        %v2753 = vsel %vm2749, %v2732, %v2714
        %v2754 = vsel %vm2749, %v2733, %v2715
        %v2755 = vsel %vm2749, %v2734, %v2716
        %v2756 = vsel %vm2749, %v2735, %v2717
        %v2757 = vsel %vm2749, %v2736, %v2718
        %v2758 = vsel %vm2749, %v2737, %v2719
        %v2759 = vsel %vm2749, %v2738, %v2720
        %v2760 = vsel %vm2749, %v2739, %v2721
        %v2761 = vsel %vm2749, %v2740, %v2722
        %v2762 = vsel %vm2749, %v2741, %v2723
        %v2763 = vsel %vm2749, %v2742, %v2724
        %v2764 = vsel %vm2749, %v2743, %v2725
        %v2765 = vsel %vm2749, %v2744, %v2726
        %v2766 = vsel %vm2749, %v2745, %v2727
        %v2767 = vsel %vm2749, %v2746, %v2728
        %2768 = vst [vmem:[#allocation2 + $0x8] sm:$0xff] %v2750
        %2769 = vst [vmem:[#allocation2 + $0x10] sm:$0xff] %v2751
        %2770 = vst [vmem:[#allocation2 + $0x18] sm:$0xff] %v2752
        %2771 = vst [vmem:[#allocation2 + $0x20] sm:$0xff] %v2753
        %2772 = vst [vmem:[#allocation2 + $0x28] sm:$0xff] %v2754
        %2773 = vst [vmem:[#allocation2 + $0x30] sm:$0xff] %v2755
        %2774 = vst [vmem:[#allocation2 + $0x38] sm:$0xff] %v2756
        %2775 = vst [vmem:[#allocation2 + $0x40] sm:$0xff] %v2757
        %2776 = vst [vmem:[#allocation2 + $0x48] sm:$0xff] %v2758
        %2777 = vst [vmem:[#allocation2 + $0x50] sm:$0xff] %v2759
        %2778 = vst [vmem:[#allocation2 + $0x58] sm:$0xff] %v2760
        %2779 = vst [vmem:[#allocation2 + $0x60] sm:$0xff] %v2761
        %2780 = vst [vmem:[#allocation2 + $0x68] sm:$0xff] %v2762
        %2781 = vst [vmem:[#allocation2 + $0x70] sm:$0xff] %v2763
        %2782 = vst [vmem:[#allocation2 + $0x78] sm:$0xff] %v2764
        %2783 = vst [vmem:[#allocation2 + $0x80] sm:$0xff] %v2765
        %2784 = vst [vmem:[#allocation2 + $0x88] sm:$0xff] %v2766
        %2785 = vst [vmem:[#allocation2 + $0x90] sm:$0xff] %v2767
        %p2786 = scmp.eq.s32.totalorder %s22, 9
        // Predicated region
        $region61: #{representation_forward.1} parent=39 // pred_check
          %p2787 = pneg %p2786
        $region62: #{representation_forward.1} parent=39 // pred_check_branch
          %2789 = sbr.rel (%p2787) target = $region64
        $region63: #{representation_forward.1} parent=39 // pred_region
          %2790 = vst [vmem:[%s5] sm:$0xff] %v2750
          %2791 = vst [vmem:[%s5 + $0x8] sm:$0xff] %v2751
          %2792 = vst [vmem:[%s5 + $0x10] sm:$0xff] %v2752
          %2793 = vst [vmem:[%s5 + $0x18] sm:$0xff] %v2753
          %2794 = vst [vmem:[%s5 + $0x20] sm:$0xff] %v2754
          %2795 = vst [vmem:[%s5 + $0x28] sm:$0xff] %v2755
          %2796 = vst [vmem:[%s5 + $0x30] sm:$0xff] %v2756
          %2797 = vst [vmem:[%s5 + $0x38] sm:$0xff] %v2757
          %2798 = vst [vmem:[%s5 + $0x40] sm:$0xff] %v2758
          %2799 = vst [vmem:[%s5 + $0x48] sm:$0xff] %v2759
          %2800 = vst [vmem:[%s5 + $0x50] sm:$0xff] %v2760
          %2801 = vst [vmem:[%s5 + $0x58] sm:$0xff] %v2761
          %2802 = vst [vmem:[%s5 + $0x60] sm:$0xff] %v2762
          %2803 = vst [vmem:[%s5 + $0x68] sm:$0xff] %v2763
          %2804 = vst [vmem:[%s5 + $0x70] sm:$0xff] %v2764
          %2805 = vst [vmem:[%s5 + $0x78] sm:$0xff] %v2765
          %2806 = vst [vmem:[%s5 + $0x80] sm:$0xff] %v2766
          %2807 = vst [vmem:[%s5 + $0x88] sm:$0xff] %v2767
        $region64: #{representation_forward.1} parent=39 // pred_fallthru
          _
        // Predicated region
        $region65: #{representation_forward.1} parent=39 // pred_check
          %p2808 = pneg %p155
        $region66: #{representation_forward.1} parent=39 // pred_check_branch
          %2810 = sbr.rel (%p2808) target = $region68
        $region67: #{representation_forward.1} parent=39 // pred_region
          _
        $region68: #{representation_forward.1} parent=39 // pred_fallthru
          _
        // Predicated region
        $region69: #{representation_forward.1} parent=39 // pred_check
          %p2811 = pneg %p155
        $region70: #{representation_forward.1} parent=39 // pred_check_branch
          %2813 = sbr.rel (%p2811) target = $region72
        $region71: #{representation_forward.1} parent=39 // pred_region
          _
        $region72: #{representation_forward.1} parent=39 // pred_fallthru
          _
      $region40: #{representation_forward.1} parent=5 // pred_fallthru
        _
      %p2814 = scmp.le.s32.totalorder 2, %s17
      // Predicated region
      $region73: #{representation_forward.1} parent=5 // pred_check
        %p2815 = pneg %p2814
      $region74: #{representation_forward.1} parent=5 // pred_check_branch
        %2817 = sbr.rel (%p2815) target = $region76
      $region75: #{representation_forward.1} parent=5 // pred_region
        %s2818 = ssub.s32 %s17, 2
      $region76: #{representation_forward.1} parent=5 // pred_fallthru
        _
    $region6: #{representation_forward.1} parent=1 // loop_footer
      %s21 = sadd.s32 1, %s17
    $region7: #{representation_forward.1} parent=1 // loop_footer_branch
      %16 = sbr.rel target = $region3
    $region8: #{representation_forward.1} parent=1 // loop_exit
      _
    %2819 = vsyncpa [#allocation5], 1
    %s2820 = scalar_lea.sflag [#allocation5], 1
    %2821 = vsyncpa %s2820, 1
    %2822 = vsyncpa [#allocation7], 1
    %s2823 = scalar_lea.sflag [#allocation7], 1
    %2824 = vsyncpa %s2823, 1

</llo_original>
